<compile_context>
chip_gen: v7x
topology: tpu7x:2x2x1
jax: 0.10.0
libtpu: 0.0.40
codegen_flags: <defaults>
</compile_context>

<pallas_src>
import functools
import math

import jax
import jax.numpy as jnp
from jax import lax
from jax.experimental import pallas as pl
from jax.experimental.pallas import tpu as pltpu


def _sigmoid(x):
    # Numerically-stable logistic on the EUP (tanh); identical to 1/(1+exp(-x)).
    return 0.5 * (jnp.tanh(0.5 * x) + 1.0)


# clamp limit equivalent to inverse_sigmoid(clip(sigmoid(x), 1e-5, 1-1e-5))
_INV_SIG_LIM = math.log((1.0 - 1e-5) / 1e-5)


# -----------------------------------------------------------------------------
# Fused kernel: token embedding -> detection heads -> box decode -> occupancy.
# Three VMEM operands (feat + 2 constant slabs), two lane-dense outputs, no
# grid — everything is tiny (<0.5 MiB total).
# -----------------------------------------------------------------------------
def _fused_bev_occ_kernel(feat_ref, wslab_ref, occ_pos_t_ref, det_ref, occ_ref, *,
                          batch, num_queries, num_classes, code_size,
                          occ_classes, din, dp, off_bin, off_wh, off_bh,
                          off_wocc):
    f32 = jnp.float32

    # ---- static views into the packed constant slab (zero-cost slicing) ----
    w_in = wslab_ref[0:din, :]                               # (Din, DP)
    b_in = wslab_ref[off_bin:off_bin + 1, :]                 # (1, DP)
    w_heads = wslab_ref[off_wh:off_wh + dp, :]               # (DP, HP)
    b_heads = wslab_ref[off_bh:off_bh + 1, :]                # (1, HP)
    w_occ_t = wslab_ref[off_wocc:off_wocc + occ_classes, :]  # (Cocc, DP) bias in col DP-1

    # ---- shared token embedding (queries on sublanes, features on lanes) ----
    feat = feat_ref[...]                                     # (BQ, Din)
    bev = jnp.tanh(jnp.dot(feat, w_in, preferred_element_type=f32) + b_in)   # (BQ, DP)

    # ---- fused detection heads: a single lane-dense MXU matmul ----
    head = jnp.dot(bev, w_heads, preferred_element_type=f32) + b_heads       # (BQ, HP)
    hp = head.shape[1]
    rb = num_classes + code_size
    col = lax.broadcasted_iota(jnp.int32, head.shape, 1)

    # reference block: inverse_sigmoid(clip(sigmoid(x))) == clamp(x, +-LIM).
    # Lane-align the reference block [rb:rb+code] with the delta block
    # [ncls:rb] with one XLU roll, then decode on the full 128-wide vreg.
    ref_aligned = pltpu.roll(head, shift=hp - code_size, axis=1)
    inv_ref = jnp.clip(ref_aligned, -_INV_SIG_LIM, _INV_SIG_LIM)

    # box decode with compile-time column roles (within the code block):
    #   cols 0,1,4 (cx,cy,cz): sigmoid(delta + inverse_sigmoid(reference))
    #   cols 2,3,5 (w,l,h):    exp(delta)
    #   cols 6,7 (sin,cos):    identity
    dcol = col - num_classes
    is_sig = (dcol == 0) | (dcol == 1) | (dcol == 4)
    is_exp = (dcol == 2) | (dcol == 3) | (dcol == 5)
    decoded = jnp.where(is_sig, _sigmoid(head + inv_ref),
                        jnp.where(is_exp, jnp.exp(head), head))              # (BQ, HP)

    # scores / labels on RAW logits: argmax(sigmoid(x)) == argmax(x) and
    # max(sigmoid(x)) == sigmoid(max(x))  (sigmoid is monotone).
    cls_masked = jnp.where(col < num_classes, head, jnp.float32(-1e30))
    lmax = jnp.max(cls_masked, axis=1, keepdims=True)                        # (BQ, 1)
    best = _sigmoid(lmax)
    label = jnp.min(jnp.where(cls_masked >= lmax, col, num_classes),
                    axis=1, keepdims=True)                                   # (BQ, 1) i32

    # Compose the detection slab in registers, then ONE unmasked full-width
    # store.  Layout: cols [ncls:ncls+code]=bbox, col rb=score, col rb+1=label.
    in_code = (col >= num_classes) & (col < rb)
    slab = jnp.where(in_code, decoded, 0.0)
    slab = jnp.where(col == rb, best, slab)
    slab = jnp.where(col == rb + 1, label.astype(f32), slab)
    det_ref[...] = slab

    # ---- occupancy head (classes on sublanes, voxels on lanes) ----
    # Batch-invariant matmul computed once; occupancy bias is folded into the
    # all-ones row DP-1 of occ_pos_t / column DP-1 of w_occ_t.
    occ_pos_t = occ_pos_t_ref[...]                                            # (DP, Nocc)
    base = jnp.dot(w_occ_t, occ_pos_t, preferred_element_type=f32)            # (Cocc, Nocc)

    nocc = base.shape[1]
    occ_all = jnp.zeros((batch, nocc), jnp.int32)
    brow = lax.broadcasted_iota(jnp.int32, occ_all.shape, 0)
    for b in range(batch):  # static unroll; batch is tiny
        mean_row = jnp.mean(bev[b * num_queries:(b + 1) * num_queries, :],
                            axis=0, keepdims=True)                            # (1, DP)
        off_col = jnp.sum(w_occ_t * mean_row, axis=1, keepdims=True)          # (Cocc, 1)
        logit_t = base + off_col                                              # (Cocc, Nocc)
        # argmax over classes == argmax of softmax over classes (dead softmax removed)
        mx = jnp.max(logit_t, axis=0, keepdims=True)
        ridx = lax.broadcasted_iota(jnp.int32, logit_t.shape, 0)
        occ_row = jnp.min(jnp.where(logit_t >= mx, ridx, occ_classes),
                          axis=0, keepdims=True)                              # (1, Nocc)
        occ_all = jnp.where(brow == b, occ_row, occ_all)
    occ_ref[...] = occ_all                                                    # single store


# -----------------------------------------------------------------------------
# Synthetic BevFusionHbirInfer
# -----------------------------------------------------------------------------
class BevFusionHbirInferPallas:
    """JAX/Pallas re-implementation with deterministic synthetic weights."""

    DP = 128   # zero-padded embed dim (lane-dense MXU contraction)
    HP = 128   # fused detection-head / output-slab width (lane-dense stores)

    def __init__(self, num_queries=64, in_dim=16, embed_dim=32, num_classes=8,
                 code_size=8, occ_hwz=(8, 8, 2), occ_classes=16, seed=0):
        assert num_classes + 2 * code_size <= self.HP
        assert num_classes + code_size + 2 <= self.HP
        assert embed_dim < self.DP          # row DP-1 is the folded-bias row
        self.Q = num_queries
        self.Din = in_dim
        self.D = embed_dim
        self.num_classes = num_classes
        self.code_size = code_size
        self.occ_hwz = tuple(occ_hwz)
        self.occ_classes = occ_classes
        self.Nocc = occ_hwz[0] * occ_hwz[1] * occ_hwz[2]

        f32 = jnp.float32
        keys = jax.random.split(jax.random.PRNGKey(seed), 12)
        s = 0.1
        self.W_img = s * jax.random.normal(keys[0], (3, in_dim), f32)
        self.W_pts = s * jax.random.normal(keys[1], (5, in_dim), f32)
        self.query_embed = s * jax.random.normal(keys[2], (num_queries, in_dim), f32)
        self.W_in = s * jax.random.normal(keys[3], (in_dim, embed_dim), f32)
        self.b_in = jnp.zeros((embed_dim,), f32)
        self.W_cls = s * jax.random.normal(keys[4], (embed_dim, num_classes), f32)
        self.b_cls = jnp.zeros((num_classes,), f32)
        self.W_reg = s * jax.random.normal(keys[5], (embed_dim, code_size), f32)
        self.b_reg = jnp.zeros((code_size,), f32)
        self.W_ref = s * jax.random.normal(keys[6], (embed_dim, 3), f32)
        self.b_ref = jnp.zeros((3,), f32)
        self.occ_pos = s * jax.random.normal(keys[7], (self.Nocc, embed_dim), f32)
        self.W_occ = s * jax.random.normal(keys[8], (embed_dim, occ_classes), f32)
        self.b_occ = jnp.zeros((occ_classes,), f32)

        # ---- ONE packed constant slab (sublane-stacked, 128 lanes wide) ----
        def _align8(x):
            return (x + 7) & ~7

        rb = num_classes + code_size
        self._off_bin = _align8(in_dim)
        self._off_wh = self._off_bin + 8
        self._off_bh = self._off_wh + self.DP
        self._off_wocc = self._off_bh + 8
        n_rows = _align8(self._off_wocc + occ_classes)

        wslab = jnp.zeros((n_rows, self.HP), f32)
        # token-embedding projection (Din rows) + bias row
        wslab = wslab.at[0:in_dim, :embed_dim].set(self.W_in)
        wslab = wslab.at[self._off_bin, :embed_dim].set(self.b_in)
        # fused detection heads (cls | reg | ref scattered on cx,cy,cz)
        wslab = wslab.at[self._off_wh:self._off_wh + embed_dim,
                         0:num_classes].set(self.W_cls)
        wslab = wslab.at[self._off_wh:self._off_wh + embed_dim,
                         num_classes:rb].set(self.W_reg)
        wslab = wslab.at[self._off_bh, 0:num_classes].set(self.b_cls)
        wslab = wslab.at[self._off_bh, num_classes:rb].set(self.b_reg)
        # reference head scattered onto code columns (cx, cy, cz) = (0, 1, 4);
        # remaining reference columns keep zero weight/bias so the kernel's
        # clamp gives inverse_sigmoid(0.5) == 0 (the "pad reference with 0.5"
        # trick folded in at compile time).
        for src, dst in enumerate((0, 1, 4)):
            wslab = wslab.at[self._off_wh:self._off_wh + embed_dim,
                             rb + dst].set(self.W_ref[:, src])
            wslab = wslab.at[self._off_bh, rb + dst].set(self.b_ref[src])
        # occupancy head (transposed), bias folded into column DP-1
        wslab = wslab.at[self._off_wocc:self._off_wocc + occ_classes,
                         :embed_dim].set(self.W_occ.T)
        wslab = wslab.at[self._off_wocc:self._off_wocc + occ_classes,
                         self.DP - 1].set(self.b_occ)
        self._wslab = wslab

        # occupancy positional features (transposed), all-ones bias row DP-1
        occ_pos_t = jnp.zeros((self.DP, self.Nocc), f32)
        occ_pos_t = occ_pos_t.at[:embed_dim, :].set(self.occ_pos.T)
        occ_pos_t = occ_pos_t.at[self.DP - 1, :].set(1.0)
        self._occ_pos_t = occ_pos_t

        self.prev_frame_info = {"prev_bev": None, "scene_token": None,
                                "ego2global": None}

    # ---------------- process_input (glue) ----------------
    def process_input(self, data):
        img = data["img"]                       # (B, 3, H, W) NCHW, like torch
        points = data["points"]                 # (B, P, 5)
        B = img.shape[0]
        # TODO(synk): lidar_net.pre_process voxelization (dynamic scatter) has
        # no clean Pallas equivalent here; use a dense per-cloud summary.
        features = jnp.mean(points, axis=1)     # (B, 5)
        coors = jnp.zeros((B, 4), jnp.int32)
        # TODO(synk): export_reference_points (grid_sample rebatch grids) stubbed.
        queries_rebatch_grid = jnp.zeros((B, self.Q, 2), jnp.float32)
        restore_bev_grid = jnp.zeros((B, self.Q, 2), jnp.float32)
        reference_points_rebatch = jnp.zeros((B, self.Q, 3), jnp.float32)
        bev_pillar_counts = jnp.ones((B, self.Q, 1), jnp.float32)
        return {
            "features": features, "coors": coors, "img": img,
            "queries_rebatch_grid": queries_rebatch_grid,
            "restore_bev_grid": restore_bev_grid,
            "reference_points_rebatch": reference_points_rebatch,
            "bev_pillar_counts": bev_pillar_counts,
        }

    # ---------------- synthetic input embedding (tiny XLA glue) ----------------
    def _build_feat(self, inputs):
        img = inputs["img"]
        B = img.shape[0]
        pooled = jnp.mean(img, axis=(2, 3))                     # (B, 3) NCHW pool
        img_feat = pooled @ self.W_img                          # tiny glue matmul
        pts_feat = inputs["features"] @ self.W_pts              # tiny glue matmul
        feat = (self.query_embed[None]
                + img_feat[:, None, :]
                + pts_feat[:, None, :])                         # (B, Q, Din)
        return feat.reshape(B * self.Q, self.Din)

    # ---------------- forward: one fused Pallas kernel ----------------
    def forward(self, data):
        inputs = self.process_input(data)
        feat = self._build_feat(inputs)                         # (B*Q, Din) unpadded
        B = data["img"].shape[0]

        kern = functools.partial(
            _fused_bev_occ_kernel, batch=B, num_queries=self.Q,
            num_classes=self.num_classes, code_size=self.code_size,
            occ_classes=self.occ_classes, din=self.Din, dp=self.DP,
            off_bin=self._off_bin, off_wh=self._off_wh, off_bh=self._off_bh,
            off_wocc=self._off_wocc)
        det, occ = pl.pallas_call(
            kern,
            out_shape=(
                jax.ShapeDtypeStruct((B * self.Q, self.HP), jnp.float32),
                jax.ShapeDtypeStruct((B, self.Nocc), jnp.int32),
            ),
            in_specs=[pl.BlockSpec(memory_space=pltpu.MemorySpace.VMEM)] * 3,
            out_specs=(
                pl.BlockSpec(memory_space=pltpu.MemorySpace.VMEM),
                pl.BlockSpec(memory_space=pltpu.MemorySpace.VMEM),
            ),
        )(feat, self._wslab, self._occ_pos_t)

        # unpack the lane-dense detection slab on the host
        det = det.reshape(B, self.Q, self.HP)
        c0 = self.num_classes
        bboxes = det[..., c0:c0 + self.code_size]
        scores = det[..., c0 + self.code_size]
        labels = det[..., c0 + self.code_size + 1].astype(jnp.int32)  # torch: int64
        result = [{"bboxes": bboxes[b], "scores": scores[b], "labels": labels[b]}
                  for b in range(B)]
        bev_results = self._update_res(result, None)

        H, W, Z = self.occ_hwz
        occ_res = occ.reshape(B, H, W, Z)
        return (bev_results, [occ_res])

    @staticmethod
    def _update_res(result, results):
        if results is None:
            results = list(result)
        else:
            results.extend(list(result))
        return results


# -----------------------------------------------------------------------------
# Pure-JAX (non-Pallas) reference for the fused kernel's math.
# -----------------------------------------------------------------------------
def _reference_outputs(model, data):
    inputs = model.process_input(data)
    feat = model._build_feat(inputs)                              # (B*Q, Din)
    B = data["img"].shape[0]
    bev = jnp.tanh(feat @ model.W_in + model.b_in)                # (B*Q, D)
    cls_logits = bev @ model.W_cls + model.b_cls
    delta = bev @ model.W_reg + model.b_reg
    ref3 = jax.nn.sigmoid(bev @ model.W_ref + model.b_ref)
    ref_pad = jnp.full((B * model.Q, model.code_size), 0.5, jnp.float32)
    ref_pad = (ref_pad.at[:, 0].set(ref3[:, 0])
                      .at[:, 1].set(ref3[:, 1])
                      .at[:, 4].set(ref3[:, 2]))
    ref_c = jnp.clip(ref_pad, 1e-5, 1.0 - 1e-5)
    inv = jnp.log(ref_c) - jnp.log(1.0 - ref_c)
    col = jnp.arange(model.code_size)[None, :]
    is_sig = (col == 0) | (col == 1) | (col == 4)
    is_exp = (col == 2) | (col == 3) | (col == 5)
    bbox = jnp.where(is_sig, jax.nn.sigmoid(delta + inv),
                     jnp.where(is_exp, jnp.exp(delta), delta))
    scores = jax.nn.sigmoid(cls_logits)
    mean_bev = jnp.mean(bev.reshape(B, model.Q, model.D), axis=1, keepdims=True)
    occ_logits = (model.occ_pos[None] + mean_bev) @ model.W_occ + model.b_occ
    return {
        "bboxes": bbox.reshape(B, model.Q, model.code_size),
        "scores": scores.reshape(B, model.Q, model.num_classes),
        "occ_logits": occ_logits,                                 # (B, Nocc, Cocc)
    }


# -----------------------------------------------------------------------------
if __name__ == "__main__":
    B = 2
    key = jax.random.PRNGKey(0)
    k_img, k_pts = jax.random.split(key)
    img = jax.random.normal(k_img, (B, 3, 16, 16), jnp.float32)   # NCHW like torch
    points = jax.random.normal(k_pts, (B, 128, 5), jnp.float32)
    data = {"img": img, "points": points}

    model = BevFusionHbirInferPallas()
    bev_results, occ_list = model.forward(data)
    jax.block_until_ready((bev_results, occ_list))

    # ---- shape / dtype sanity ----
    assert len(bev_results) == B
    assert bev_results[0]["bboxes"].shape == (model.Q, model.code_size)
    assert bev_results[0]["scores"].shape == (model.Q,)
    assert bev_results[0]["labels"].dtype == jnp.int32            # torch: int64
    assert occ_list[0].shape == (B,) + model.occ_hwz
    assert occ_list[0].dtype == jnp.int32

    # ---- numerical check against the pure-JAX reference ----
    ref = _reference_outputs(model, data)
    kb = jnp.stack([r["bboxes"] for r in bev_results])            # (B, Q, code)
    ks = jnp.stack([r["scores"] for r in bev_results])            # (B, Q)
    kl = jnp.stack([r["labels"] for r in bev_results])            # (B, Q)
    assert bool(jnp.allclose(kb, ref["bboxes"], atol=5e-3, rtol=1e-2))
    assert bool(jnp.allclose(ks, jnp.max(ref["scores"], axis=-1), atol=5e-3, rtol=1e-2))
    # tie-tolerant argmax checks (labels / occupancy)
    sc_at = jnp.take_along_axis(ref["scores"], kl[..., None], axis=-1)[..., 0]
    assert bool(jnp.all(sc_at >= jnp.max(ref["scores"], axis=-1) - 5e-3))
    occ_idx = occ_list[0].reshape(B, model.Nocc)
    lg_at = jnp.take_along_axis(ref["occ_logits"], occ_idx[..., None], axis=-1)[..., 0]
    assert bool(jnp.all(lg_at >= jnp.max(ref["occ_logits"], axis=-1) - 5e-3))

    print("KERNEL_OK")
</pallas_src>

<mosaic_0001>
module attributes {stable_mosaic.version = 11 : i64} {
  func.func @_fused_bev_occ_kernel(%arg0: memref<128x16xf32, #tpu.memory_space<vmem>>, %arg1: memref<176x128xf32, #tpu.memory_space<vmem>>, %arg2: memref<128x128xf32, #tpu.memory_space<vmem>>, %arg3: memref<128x128xf32, #tpu.memory_space<vmem>>, %arg4: memref<2x128xi32, #tpu.memory_space<vmem>>) attributes {dimension_semantics = [], scalar_prefetch = 0 : i64, scratch_operands = 0 : i64, tpu.core_type = #tpu.core_type<tc>} {
    %c0 = arith.constant 0 : index
    %c0_0 = arith.constant 0 : index
    %0 = vector.load %arg1[%c0, %c0_0] : memref<176x128xf32, #tpu.memory_space<vmem>>, vector<16x128xf32>
    %c16 = arith.constant 16 : index
    %c0_1 = arith.constant 0 : index
    %1 = vector.load %arg1[%c16, %c0_1] : memref<176x128xf32, #tpu.memory_space<vmem>>, vector<1x128xf32>
    %c24 = arith.constant 24 : index
    %c0_2 = arith.constant 0 : index
    %2 = vector.load %arg1[%c24, %c0_2] : memref<176x128xf32, #tpu.memory_space<vmem>>, vector<128x128xf32>
    %c152 = arith.constant 152 : index
    %c0_3 = arith.constant 0 : index
    %3 = vector.load %arg1[%c152, %c0_3] : memref<176x128xf32, #tpu.memory_space<vmem>>, vector<1x128xf32>
    %c160 = arith.constant 160 : index
    %c0_4 = arith.constant 0 : index
    %4 = vector.load %arg1[%c160, %c0_4] : memref<176x128xf32, #tpu.memory_space<vmem>>, vector<16x128xf32>
    %c0_5 = arith.constant 0 : index
    %c0_6 = arith.constant 0 : index
    %5 = vector.load %arg0[%c0_5, %c0_6] : memref<128x16xf32, #tpu.memory_space<vmem>>, vector<128x16xf32>
    %cst = arith.constant dense<0.000000e+00> : vector<128x128xf32>
    %6 = tpu.matmul %5, %0, %cst {dimension_numbers = #tpu.dot_dimension_numbers<[1], [0], [0], [1], [0, 0, 1, 1], [], []>} : vector<128x16xf32>, vector<16x128xf32>, vector<128x128xf32> -> vector<128x128xf32>
    %7 = vector.broadcast %1 : vector<1x128xf32> to vector<128x128xf32>
    %8 = arith.addf %6, %7 : vector<128x128xf32>
    %9 = math.tanh %8 : vector<128x128xf32>
    %cst_7 = arith.constant dense<0.000000e+00> : vector<128x128xf32>
    %10 = tpu.matmul %9, %2, %cst_7 {dimension_numbers = #tpu.dot_dimension_numbers<[1], [0], [0], [1], [0, 0, 1, 1], [], []>} : vector<128x128xf32>, vector<128x128xf32>, vector<128x128xf32> -> vector<128x128xf32>
    %11 = vector.broadcast %3 : vector<1x128xf32> to vector<128x128xf32>
    %12 = arith.addf %10, %11 : vector<128x128xf32>
    %13 = tpu.iota {dimensions = array<i32: 1>} : vector<128x128xi32>
    %c120_i32 = arith.constant 120 : i32
    %14 = tpu.dynamic_rotate %12 by %c120_i32 dim 1 : vector<128x128xf32>, i32 -> vector<128x128xf32>
    %cst_8 = arith.constant -11.5129156 : f32
    %cst_9 = arith.constant 11.5129156 : f32
    %15 = vector.broadcast %cst_8 : f32 to vector<128x128xf32>
    %16 = arith.maximumf %15, %14 : vector<128x128xf32>
    %17 = vector.broadcast %cst_9 : f32 to vector<128x128xf32>
    %18 = arith.minimumf %17, %16 : vector<128x128xf32>
    %c8_i32 = arith.constant 8 : i32
    %19 = vector.broadcast %c8_i32 : i32 to vector<128x128xi32>
    %20 = arith.subi %13, %19 : vector<128x128xi32>
    %c0_i32 = arith.constant 0 : i32
    %21 = vector.broadcast %c0_i32 : i32 to vector<128x128xi32>
    %22 = arith.cmpi eq, %20, %21 : vector<128x128xi32>
    %c1_i32 = arith.constant 1 : i32
    %23 = vector.broadcast %c1_i32 : i32 to vector<128x128xi32>
    %24 = arith.cmpi eq, %20, %23 : vector<128x128xi32>
    %25 = arith.ori %22, %24 : vector<128x128xi1>
    %c4_i32 = arith.constant 4 : i32
    %26 = vector.broadcast %c4_i32 : i32 to vector<128x128xi32>
    %27 = arith.cmpi eq, %20, %26 : vector<128x128xi32>
    %28 = arith.ori %25, %27 : vector<128x128xi1>
    %c2_i32 = arith.constant 2 : i32
    %29 = vector.broadcast %c2_i32 : i32 to vector<128x128xi32>
    %30 = arith.cmpi eq, %20, %29 : vector<128x128xi32>
    %c3_i32 = arith.constant 3 : i32
    %31 = vector.broadcast %c3_i32 : i32 to vector<128x128xi32>
    %32 = arith.cmpi eq, %20, %31 : vector<128x128xi32>
    %33 = arith.ori %30, %32 : vector<128x128xi1>
    %c5_i32 = arith.constant 5 : i32
    %34 = vector.broadcast %c5_i32 : i32 to vector<128x128xi32>
    %35 = arith.cmpi eq, %20, %34 : vector<128x128xi32>
    %36 = arith.ori %33, %35 : vector<128x128xi1>
    %37 = arith.addf %12, %18 : vector<128x128xf32>
    %cst_10 = arith.constant 5.000000e-01 : f32
    %38 = vector.broadcast %cst_10 : f32 to vector<128x128xf32>
    %39 = arith.mulf %38, %37 : vector<128x128xf32>
    %40 = math.tanh %39 : vector<128x128xf32>
    %cst_11 = arith.constant 1.000000e+00 : f32
    %41 = vector.broadcast %cst_11 : f32 to vector<128x128xf32>
    %42 = arith.addf %40, %41 : vector<128x128xf32>
    %cst_12 = arith.constant 5.000000e-01 : f32
    %43 = vector.broadcast %cst_12 : f32 to vector<128x128xf32>
    %44 = arith.mulf %43, %42 : vector<128x128xf32>
    %45 = math.exp %12 : vector<128x128xf32>
    %46 = arith.select %36, %45, %12 : vector<128x128xi1>, vector<128x128xf32>
    %47 = arith.select %28, %44, %46 : vector<128x128xi1>, vector<128x128xf32>
    %c8_i32_13 = arith.constant 8 : i32
    %48 = vector.broadcast %c8_i32_13 : i32 to vector<128x128xi32>
    %49 = arith.cmpi slt, %13, %48 : vector<128x128xi32>
    %cst_14 = arith.constant -1.000000e+30 : f32
    %50 = vector.broadcast %cst_14 : f32 to vector<128x128xf32>
    %51 = arith.select %49, %12, %50 : vector<128x128xi1>, vector<128x128xf32>
    %cst_15 = arith.constant dense<0xFF800000> : vector<128xf32>
    %52 = vector.multi_reduction <maximumf>, %51, %cst_15 [1] : vector<128x128xf32> to vector<128xf32>
    %53 = vector.shape_cast %52 : vector<128xf32> to vector<128x1xf32>
    %cst_16 = arith.constant 5.000000e-01 : f32
    %54 = vector.broadcast %cst_16 : f32 to vector<128x1xf32>
    %55 = arith.mulf %54, %53 : vector<128x1xf32>
    %56 = math.tanh %55 : vector<128x1xf32>
    %cst_17 = arith.constant 1.000000e+00 : f32
    %57 = vector.broadcast %cst_17 : f32 to vector<128x1xf32>
    %58 = arith.addf %56, %57 : vector<128x1xf32>
    %cst_18 = arith.constant 5.000000e-01 : f32
    %59 = vector.broadcast %cst_18 : f32 to vector<128x1xf32>
    %60 = arith.mulf %59, %58 : vector<128x1xf32>
    %61 = vector.broadcast %53 : vector<128x1xf32> to vector<128x128xf32>
    %62 = arith.cmpf oge, %51, %61 : vector<128x128xf32>
    %c8_i32_19 = arith.constant 8 : i32
    %63 = vector.broadcast %c8_i32_19 : i32 to vector<128x128xi32>
    %64 = arith.select %62, %13, %63 : vector<128x128xi1>, vector<128x128xi32>
    %cst_20 = arith.constant dense<2147483647> : vector<128xi32>
    %65 = vector.multi_reduction <minsi>, %64, %cst_20 [1] : vector<128x128xi32> to vector<128xi32>
    %66 = vector.shape_cast %65 : vector<128xi32> to vector<128x1xi32>
    %c8_i32_21 = arith.constant 8 : i32
    %67 = vector.broadcast %c8_i32_21 : i32 to vector<128x128xi32>
    %68 = arith.cmpi sge, %13, %67 : vector<128x128xi32>
    %c16_i32 = arith.constant 16 : i32
    %69 = vector.broadcast %c16_i32 : i32 to vector<128x128xi32>
    %70 = arith.cmpi slt, %13, %69 : vector<128x128xi32>
    %71 = arith.andi %68, %70 : vector<128x128xi1>
    %cst_22 = arith.constant 0.000000e+00 : f32
    %72 = vector.broadcast %cst_22 : f32 to vector<128x128xf32>
    %73 = arith.select %71, %47, %72 : vector<128x128xi1>, vector<128x128xf32>
    %c16_i32_23 = arith.constant 16 : i32
    %74 = vector.broadcast %c16_i32_23 : i32 to vector<128x128xi32>
    %75 = arith.cmpi eq, %13, %74 : vector<128x128xi32>
    %76 = vector.shape_cast %60 : vector<128x1xf32> to vector<128x1xf32>
    %77 = vector.broadcast %76 : vector<128x1xf32> to vector<128x128xf32>
    %78 = arith.select %75, %77, %73 : vector<128x128xi1>, vector<128x128xf32>
    %c17_i32 = arith.constant 17 : i32
    %79 = vector.broadcast %c17_i32 : i32 to vector<128x128xi32>
    %80 = arith.cmpi eq, %13, %79 : vector<128x128xi32>
    %81 = arith.sitofp %66 : vector<128x1xi32> to vector<128x1xf32>
    %82 = vector.shape_cast %81 : vector<128x1xf32> to vector<128x1xf32>
    %83 = vector.broadcast %82 : vector<128x1xf32> to vector<128x128xf32>
    %84 = arith.select %80, %83, %78 : vector<128x128xi1>, vector<128x128xf32>
    %c0_24 = arith.constant 0 : index
    %c0_25 = arith.constant 0 : index
    %85 = vector.load %arg3[%c0_24, %c0_25] : memref<128x128xf32, #tpu.memory_space<vmem>>, vector<128x128xf32>
    tpu.vector_store %arg3[%c0_24, %c0_25], %84 {strides = array<i32>} : memref<128x128xf32, #tpu.memory_space<vmem>>, vector<128x128xf32>,
    %c0_26 = arith.constant 0 : index
    %c0_27 = arith.constant 0 : index
    %86 = vector.load %arg2[%c0_26, %c0_27] : memref<128x128xf32, #tpu.memory_space<vmem>>, vector<128x128xf32>
    %cst_28 = arith.constant dense<0.000000e+00> : vector<16x128xf32>
    %87 = tpu.matmul %4, %86, %cst_28 {dimension_numbers = #tpu.dot_dimension_numbers<[1], [0], [0], [1], [0, 0, 1, 1], [], []>} : vector<16x128xf32>, vector<128x128xf32>, vector<16x128xf32> -> vector<16x128xf32>
    %c0_i32_29 = arith.constant 0 : i32
    %88 = vector.broadcast %c0_i32_29 : i32 to vector<2x128xi32>
    %89 = tpu.iota {dimensions = array<i32: 0>} : vector<2x128xi32>
    %90 = vector.extract_strided_slice %9 {offsets = [0, 0], sizes = [64, 128], strides = [1, 1]} : vector<128x128xf32> to vector<64x128xf32>
    %cst_30 = arith.constant dense<0.000000e+00> : vector<128xf32>
    %91 = vector.multi_reduction <add>, %90, %cst_30 [0] : vector<64x128xf32> to vector<128xf32>
    %92 = vector.shape_cast %91 : vector<128xf32> to vector<1x128xf32>
    %cst_31 = arith.constant 6.400000e+01 : f32
    %93 = vector.broadcast %cst_31 : f32 to vector<1x128xf32>
    %94 = arith.divf %92, %93 : vector<1x128xf32>
    %95 = vector.broadcast %94 : vector<1x128xf32> to vector<16x128xf32>
    %96 = arith.mulf %4, %95 : vector<16x128xf32>
    %cst_32 = arith.constant dense<0.000000e+00> : vector<16xf32>
    %97 = vector.multi_reduction <add>, %96, %cst_32 [1] : vector<16x128xf32> to vector<16xf32>
    %98 = vector.shape_cast %97 : vector<16xf32> to vector<16x1xf32>
    %99 = vector.broadcast %98 : vector<16x1xf32> to vector<16x128xf32>
    %100 = arith.addf %87, %99 : vector<16x128xf32>
    %cst_33 = arith.constant dense<0xFF800000> : vector<128xf32>
    %101 = vector.multi_reduction <maximumf>, %100, %cst_33 [0] : vector<16x128xf32> to vector<128xf32>
    %102 = vector.shape_cast %101 : vector<128xf32> to vector<1x128xf32>
    %103 = tpu.iota {dimensions = array<i32: 0>} : vector<16x128xi32>
    %104 = vector.broadcast %102 : vector<1x128xf32> to vector<16x128xf32>
    %105 = arith.cmpf oge, %100, %104 : vector<16x128xf32>
    %c16_i32_34 = arith.constant 16 : i32
    %106 = vector.broadcast %c16_i32_34 : i32 to vector<16x128xi32>
    %107 = arith.select %105, %103, %106 : vector<16x128xi1>, vector<16x128xi32>
    %cst_35 = arith.constant dense<2147483647> : vector<128xi32>
    %108 = vector.multi_reduction <minsi>, %107, %cst_35 [0] : vector<16x128xi32> to vector<128xi32>
    %109 = vector.shape_cast %108 : vector<128xi32> to vector<1x128xi32>
    %c0_i32_36 = arith.constant 0 : i32
    %110 = vector.broadcast %c0_i32_36 : i32 to vector<2x128xi32>
    %111 = arith.cmpi eq, %89, %110 : vector<2x128xi32>
    %112 = vector.shape_cast %109 : vector<1x128xi32> to vector<1x128xi32>
    %113 = vector.broadcast %112 : vector<1x128xi32> to vector<2x128xi32>
    %114 = arith.select %111, %113, %88 : vector<2x128xi1>, vector<2x128xi32>
    %115 = vector.extract_strided_slice %9 {offsets = [64, 0], sizes = [64, 128], strides = [1, 1]} : vector<128x128xf32> to vector<64x128xf32>
    %cst_37 = arith.constant dense<0.000000e+00> : vector<128xf32>
    %116 = vector.multi_reduction <add>, %115, %cst_37 [0] : vector<64x128xf32> to vector<128xf32>
    %117 = vector.shape_cast %116 : vector<128xf32> to vector<1x128xf32>
    %cst_38 = arith.constant 6.400000e+01 : f32
    %118 = vector.broadcast %cst_38 : f32 to vector<1x128xf32>
    %119 = arith.divf %117, %118 : vector<1x128xf32>
    %120 = vector.broadcast %119 : vector<1x128xf32> to vector<16x128xf32>
    %121 = arith.mulf %4, %120 : vector<16x128xf32>
    %cst_39 = arith.constant dense<0.000000e+00> : vector<16xf32>
    %122 = vector.multi_reduction <add>, %121, %cst_39 [1] : vector<16x128xf32> to vector<16xf32>
    %123 = vector.shape_cast %122 : vector<16xf32> to vector<16x1xf32>
    %124 = vector.broadcast %123 : vector<16x1xf32> to vector<16x128xf32>
    %125 = arith.addf %87, %124 : vector<16x128xf32>
    %cst_40 = arith.constant dense<0xFF800000> : vector<128xf32>
    %126 = vector.multi_reduction <maximumf>, %125, %cst_40 [0] : vector<16x128xf32> to vector<128xf32>
    %127 = vector.shape_cast %126 : vector<128xf32> to vector<1x128xf32>
    %128 = tpu.iota {dimensions = array<i32: 0>} : vector<16x128xi32>
    %129 = vector.broadcast %127 : vector<1x128xf32> to vector<16x128xf32>
    %130 = arith.cmpf oge, %125, %129 : vector<16x128xf32>
    %c16_i32_41 = arith.constant 16 : i32
    %131 = vector.broadcast %c16_i32_41 : i32 to vector<16x128xi32>
    %132 = arith.select %130, %128, %131 : vector<16x128xi1>, vector<16x128xi32>
    %cst_42 = arith.constant dense<2147483647> : vector<128xi32>
    %133 = vector.multi_reduction <minsi>, %132, %cst_42 [0] : vector<16x128xi32> to vector<128xi32>
    %134 = vector.shape_cast %133 : vector<128xi32> to vector<1x128xi32>
    %c1_i32_43 = arith.constant 1 : i32
    %135 = vector.broadcast %c1_i32_43 : i32 to vector<2x128xi32>
    %136 = arith.cmpi eq, %89, %135 : vector<2x128xi32>
    %137 = vector.shape_cast %134 : vector<1x128xi32> to vector<1x128xi32>
    %138 = vector.broadcast %137 : vector<1x128xi32> to vector<2x128xi32>
    %139 = arith.select %136, %138, %114 : vector<2x128xi1>, vector<2x128xi32>
    %c0_44 = arith.constant 0 : index
    %c0_45 = arith.constant 0 : index
    %140 = vector.load %arg4[%c0_44, %c0_45] : memref<2x128xi32, #tpu.memory_space<vmem>>, vector<2x128xi32>
    tpu.vector_store %arg4[%c0_44, %c0_45], %139 {strides = array<i32>} : memref<2x128xi32, #tpu.memory_space<vmem>>, vector<2x128xi32>,
    return
  }
}

</mosaic_0001>

<llo_original>
// kernel: tpu_custom_call.1
$region0: #{tpu_custom_call.1}
  #allocation0 [shape = 'u32[]', space=smem, size = 0x4, offset = 0x4, fixed_abs, tag = 'smem constant byte address 0x4 - core index']
  #allocation1 [shape = 'u32[144,128]{1,0:T(1,128)}', space=vmem, size = 0x12000, scoped, tag = 'internal scratch']
  %s0 = inlined_call_operand.vmem [shape: f32[128,16], index: 0, kind: input, shape index: {}]
  %s1 = inlined_call_operand.hbm [shape: f32[176,128], index: 1, kind: input, shape index: {}]
  %s2 = inlined_call_operand.vmem [shape: f32[128,128], index: 2, kind: input, shape index: {}]
  %s3 = inlined_call_operand.hbm [shape: f32[128,128], index: 3, kind: output, shape index: {0}]
  %s4 = inlined_call_operand.hbm [shape: s32[2,128], index: 4, kind: output, shape index: {1}]
  %5 = xla_tuple %s3, %s4
  %s6 = sld [smem:[#allocation0]]
  $region34: #{tpu_custom_call.1} parent=0
    _
  %s8 = ssub.s32 1, %s6
  %s9 = scalar_select 0, %s8, %s6
  $region1: #{tpu_custom_call.1} parent=0
    #allocation2 [shape = 'u8[90112]{0}', space=vmem, size = 0x16000, scoped, tag = 'input window, operand 1, single buffered']
    #allocation3 [shape = 's32[1]{0}', space=sflag, size = 0x4, scoped, tag = 'scoped memory for tpu_custom_call.1']
    #allocation4 [shape = 's32[1]{0}', space=sflag, size = 0x4, scoped, tag = 'scoped memory for tpu_custom_call.1']
    #allocation5 [shape = 'u8[65536]{0}', space=vmem, size = 0x10000, scoped, tag = 'output window, operand 0, single buffered']
    #allocation6 [shape = 'u8[1024]{0}', space=vmem, size = 0x400, scoped, tag = 'output window, operand 1, single buffered']
    #allocation7 [shape = 's32[1]{0}', space=sflag, size = 0x4, scoped, tag = 'scoped memory for tpu_custom_call.1']
    %10 = vsyncpa [#allocation3], 0
    %11 = vsyncpa [#allocation4], 0
    %12 = vsyncpa [#allocation7], 0
    // Predicated region
    $region2: #{tpu_custom_call.1} parent=1 // pred_check
      _
    $region3: #{tpu_custom_call.1} parent=1 // pred_check_branch
      %14 = sbr.rel (0) target = $region5
    $region4: #{tpu_custom_call.1} parent=1 // pred_region
      _
    $region5: #{tpu_custom_call.1} parent=1 // pred_fallthru
      _
    // Predicated region
    $region6: #{tpu_custom_call.1} parent=1 // pred_check
      _
    $region7: #{tpu_custom_call.1} parent=1 // pred_check_branch
      %16 = sbr.rel (0) target = $region9
    $region8: #{tpu_custom_call.1} parent=1 // pred_region
      %s18 = ssub.s32 2816, 2816
      %19 = vsyncadd [#allocation3], %s18
      %s20 = sshll.u32 [#allocation2], 4
      %s21 = int_to_ptr.vmem [resolvable:$true] %s20
      %26 = dma.hbm_to_vmem [thread:$0]  %s1, 2816, %s21, [#allocation3], 128, 128, 8
    $region9: #{tpu_custom_call.1} parent=1 // pred_fallthru
      _
    // Predicated region
    $region10: #{tpu_custom_call.1} parent=1 // pred_check
      _
    $region11: #{tpu_custom_call.1} parent=1 // pred_check_branch
      %28 = sbr.rel (0) target = $region13
    $region12: #{tpu_custom_call.1} parent=1 // pred_region
      _
    $region13: #{tpu_custom_call.1} parent=1 // pred_fallthru
      _
    // Predicated region
    $region14: #{tpu_custom_call.1} parent=1 // pred_check
      _
    $region15: #{tpu_custom_call.1} parent=1 // pred_check_branch
      %30 = sbr.rel (0) target = $region17
    $region16: #{tpu_custom_call.1} parent=1 // pred_region
      %31 = dma.done [#allocation3], 2816
    $region17: #{tpu_custom_call.1} parent=1 // pred_fallthru
      _
    %v32 = vld [vmem:[#allocation2] sm:$0xff]
    %v33 = vld [vmem:[#allocation2 + $0x8] sm:$0xff]
    %v34 = vld [vmem:[#allocation2 + $0x10] sm:$0x1]
    %v35 = vld [vmem:[#allocation2 + $0x18] sm:$0xff]
    %v36 = vld [vmem:[#allocation2 + $0x20] sm:$0xff]
    %v37 = vld [vmem:[#allocation2 + $0x28] sm:$0xff]
    %v38 = vld [vmem:[#allocation2 + $0x30] sm:$0xff]
    %v39 = vld [vmem:[#allocation2 + $0x38] sm:$0xff]
    %v40 = vld [vmem:[#allocation2 + $0x40] sm:$0xff]
    %v41 = vld [vmem:[#allocation2 + $0x48] sm:$0xff]
    %v42 = vld [vmem:[#allocation2 + $0x50] sm:$0xff]
    %v43 = vld [vmem:[#allocation2 + $0x58] sm:$0xff]
    %v44 = vld [vmem:[#allocation2 + $0x60] sm:$0xff]
    %v45 = vld [vmem:[#allocation2 + $0x68] sm:$0xff]
    %v46 = vld [vmem:[#allocation2 + $0x70] sm:$0xff]
    %v47 = vld [vmem:[#allocation2 + $0x78] sm:$0xff]
    %v48 = vld [vmem:[#allocation2 + $0x80] sm:$0xff]
    %v49 = vld [vmem:[#allocation2 + $0x88] sm:$0xff]
    %v50 = vld [vmem:[#allocation2 + $0x90] sm:$0xff]
    %v51 = vld [vmem:[#allocation2 + $0x98] sm:$0x1]
    %v52 = vld [vmem:[#allocation2 + $0xa0] sm:$0xff]
    %v53 = vld [vmem:[#allocation2 + $0xa8] sm:$0xff]
    %v54 = vld [vmem:[%s0] sm:$0xff]
    %v55 = vld [vmem:[%s0 + $0x8] sm:$0xff]
    %v56 = vld [vmem:[%s0 + $0x10] sm:$0xff]
    %v57 = vld [vmem:[%s0 + $0x18] sm:$0xff]
    %v58 = vld [vmem:[%s0 + $0x20] sm:$0xff]
    %v59 = vld [vmem:[%s0 + $0x28] sm:$0xff]
    %v60 = vld [vmem:[%s0 + $0x30] sm:$0xff]
    %v61 = vld [vmem:[%s0 + $0x38] sm:$0xff]
    %v62 = vld [vmem:[%s0 + $0x40] sm:$0xff]
    %v63 = vld [vmem:[%s0 + $0x48] sm:$0xff]
    %v64 = vld [vmem:[%s0 + $0x50] sm:$0xff]
    %v65 = vld [vmem:[%s0 + $0x58] sm:$0xff]
    %v66 = vld [vmem:[%s0 + $0x60] sm:$0xff]
    %v67 = vld [vmem:[%s0 + $0x68] sm:$0xff]
    %v68 = vld [vmem:[%s0 + $0x70] sm:$0xff]
    %v69 = vld [vmem:[%s0 + $0x78] sm:$0xff]
    %v70 = vlaneseq
    %v71 = vshrl.u32 %v70, 7
    %v72 = vsub.s32 0, %v71
    %v73 = vrot.slane %v34, %v72
    %vm74 = vcmask 130048
    %v76 = vsel %vm74, %v54, 0
    %v79 = vsel %vm74, %v55, 0
    %v82 = vsel %vm74, %v56, 0
    %v85 = vsel %vm74, %v57, 0
    %v88 = vsel %vm74, %v58, 0
    %v91 = vsel %vm74, %v59, 0
    %v94 = vsel %vm74, %v60, 0
    %v97 = vsel %vm74, %v61, 0
    %v100 = vsel %vm74, %v62, 0
    %v103 = vsel %vm74, %v63, 0
    %v106 = vsel %vm74, %v64, 0
    %v109 = vsel %vm74, %v65, 0
    %v112 = vsel %vm74, %v66, 0
    %v115 = vsel %vm74, %v67, 0
    %v118 = vsel %vm74, %v68, 0
    %v121 = vsel %vm74, %v69, 0
    %123 = vmatprep.subr.mxu0 0.0
    %124 = vmatpush1.msra.mxu0 %v32
    %125 = vmatprep.subr.mxu0 0.0
    %126 = vmatpush1.msra.mxu0 %v33
    %127 = vmatprep.subr.mxu0 0.0
    %128 = vmatpush1.msra.mxu0 0.0
    %129 = vmatprep.subr.mxu0 0.0
    %130 = vmatpush1.msra.mxu0 0.0
    %131 = vmatprep.subr.mxu0 0.0
    %132 = vmatpush1.msra.mxu0 0.0
    %133 = vmatprep.subr.mxu0 0.0
    %134 = vmatpush1.msra.mxu0 0.0
    %135 = vmatprep.subr.mxu0 0.0
    %136 = vmatpush1.msra.mxu0 0.0
    %137 = vmatprep.subr.mxu0 0.0
    %138 = vmatpush1.msra.mxu0 0.0
    %139 = vmatprep.subr.mxu0 0.0
    %140 = vmatpush1.msra.mxu0 0.0
    %141 = vmatprep.subr.mxu0 0.0
    %142 = vmatpush1.msra.mxu0 0.0
    %143 = vmatprep.subr.mxu0 0.0
    %144 = vmatpush1.msra.mxu0 0.0
    %145 = vmatprep.subr.mxu0 0.0
    %146 = vmatpush1.msra.mxu0 0.0
    %147 = vmatprep.subr.mxu0 0.0
    %148 = vmatpush1.msra.mxu0 0.0
    %149 = vmatprep.subr.mxu0 0.0
    %150 = vmatpush1.msra.mxu0 0.0
    %151 = vmatprep.subr.mxu0 0.0
    %152 = vmatpush1.msra.mxu0 0.0
    %153 = vmatprep.subr.mxu0 0.0
    %154 = vmatpush1.msra.mxu0 0.0
    %155 = vmatprep.subr.mxu0 0.0
    %156 = vmatpush1.msra.mxu0 0.0
    %157 = vmatprep.subr.mxu0 0.0
    %158 = vmatpush1.msra.mxu0 0.0
    %159 = vmatprep.subr.mxu0 0.0
    %160 = vmatpush1.msra.mxu0 0.0
    %161 = vmatprep.subr.mxu0 0.0
    %162 = vmatpush1.msra.mxu0 0.0
    %163 = vmatprep.subr.mxu0 0.0
    %164 = vmatpush1.msra.mxu0 0.0
    %165 = vmatprep.subr.mxu0 0.0
    %166 = vmatpush1.msra.mxu0 0.0
    %167 = vmatprep.subr.mxu0 0.0
    %168 = vmatpush1.msra.mxu0 0.0
    %169 = vmatprep.subr.mxu0 0.0
    %170 = vmatpush1.msra.mxu0 0.0
    %171 = vmatprep.subr.mxu0 0.0
    %172 = vmatpush1.msra.mxu0 0.0
    %173 = vmatprep.subr.mxu0 0.0
    %174 = vmatpush1.msra.mxu0 0.0
    %175 = vmatprep.subr.mxu0 0.0
    %176 = vmatpush1.msra.mxu0 0.0
    %177 = vmatprep.subr.mxu0 0.0
    %178 = vmatpush1.msra.mxu0 0.0
    %179 = vmatprep.subr.mxu0 0.0
    %180 = vmatpush1.msra.mxu0 0.0
    %181 = vmatprep.subr.mxu0 0.0
    %182 = vmatpush1.msra.mxu0 0.0
    %183 = vmatprep.subr.mxu0 0.0
    %184 = vmatpush1.msra.mxu0 0.0
    %185 = vmatprep.subr.mxu0 0.0
    %186 = vmatpush1.msra.mxu0 0.0
    %187 = vmatprep.mubr.f32.mxu0 0.0
    %188 = vmatmul.mubr.f32.gmra.mrb[0].mxu0 %v76
    %v189 = vpop.f32.mrb[0].mxu0
    %v190 = vadd.f32 %v73, %v189
    %v191 = vpop.f32.mrb[0].mxu0
    %192 = vmatprep.mubr.f32.mxu0 0.0
    %193 = vmatmul.mubr.f32.gmra.mrb[0].mxu0 %v79
    %v194 = vpop.f32.mrb[0].mxu0
    %v195 = vadd.f32 %v73, %v194
    %v196 = vpop.f32.mrb[0].mxu0
    %197 = vmatprep.mubr.f32.mxu0 0.0
    %198 = vmatmul.mubr.f32.gmra.mrb[0].mxu0 %v82
    %v199 = vpop.f32.mrb[0].mxu0
    %v200 = vadd.f32 %v73, %v199
    %v201 = vpop.f32.mrb[0].mxu0
    %202 = vmatprep.mubr.f32.mxu0 0.0
    %203 = vmatmul.mubr.f32.gmra.mrb[0].mxu0 %v85
    %v204 = vpop.f32.mrb[0].mxu0
    %v205 = vadd.f32 %v73, %v204
    %v206 = vpop.f32.mrb[0].mxu0
    %207 = vmatprep.mubr.f32.mxu0 0.0
    %208 = vmatmul.mubr.f32.gmra.mrb[0].mxu0 %v88
    %v209 = vpop.f32.mrb[0].mxu0
    %v210 = vadd.f32 %v73, %v209
    %v211 = vpop.f32.mrb[0].mxu0
    %212 = vmatprep.mubr.f32.mxu0 0.0
    %213 = vmatmul.mubr.f32.gmra.mrb[0].mxu0 %v91
    %v214 = vpop.f32.mrb[0].mxu0
    %v215 = vadd.f32 %v73, %v214
    %v216 = vpop.f32.mrb[0].mxu0
    %217 = vmatprep.mubr.f32.mxu0 0.0
    %218 = vmatmul.mubr.f32.gmra.mrb[0].mxu0 %v94
    %v219 = vpop.f32.mrb[0].mxu0
    %v220 = vadd.f32 %v73, %v219
    %v221 = vpop.f32.mrb[0].mxu0
    %222 = vmatprep.mubr.f32.mxu0 0.0
    %223 = vmatmul.mubr.f32.gmra.mrb[0].mxu0 %v97
    %v224 = vpop.f32.mrb[0].mxu0
    %v225 = vadd.f32 %v73, %v224
    %v226 = vpop.f32.mrb[0].mxu0
    %227 = vmatprep.mubr.f32.mxu0 0.0
    %228 = vmatmul.mubr.f32.gmra.mrb[0].mxu0 %v100
    %v229 = vpop.f32.mrb[0].mxu0
    %v230 = vadd.f32 %v73, %v229
    %v231 = vpop.f32.mrb[0].mxu0
    %232 = vmatprep.mubr.f32.mxu0 0.0
    %233 = vmatmul.mubr.f32.gmra.mrb[0].mxu0 %v103
    %v234 = vpop.f32.mrb[0].mxu0
    %v235 = vadd.f32 %v73, %v234
    %v236 = vpop.f32.mrb[0].mxu0
    %237 = vmatprep.mubr.f32.mxu0 0.0
    %238 = vmatmul.mubr.f32.gmra.mrb[0].mxu0 %v106
    %v239 = vpop.f32.mrb[0].mxu0
    %v240 = vadd.f32 %v73, %v239
    %v241 = vpop.f32.mrb[0].mxu0
    %242 = vmatprep.mubr.f32.mxu0 0.0
    %243 = vmatmul.mubr.f32.gmra.mrb[0].mxu0 %v109
    %v244 = vpop.f32.mrb[0].mxu0
    %v245 = vadd.f32 %v73, %v244
    %v246 = vpop.f32.mrb[0].mxu0
    %247 = vmatprep.mubr.f32.mxu0 0.0
    %248 = vmatmul.mubr.f32.gmra.mrb[0].mxu0 %v112
    %v249 = vpop.f32.mrb[0].mxu0
    %v250 = vadd.f32 %v73, %v249
    %v251 = vpop.f32.mrb[0].mxu0
    %252 = vmatprep.mubr.f32.mxu0 0.0
    %253 = vmatmul.mubr.f32.gmra.mrb[0].mxu0 %v115
    %v254 = vpop.f32.mrb[0].mxu0
    %v255 = vadd.f32 %v73, %v254
    %v256 = vpop.f32.mrb[0].mxu0
    %257 = vmatprep.mubr.f32.mxu0 0.0
    %258 = vmatmul.mubr.f32.gmra.mrb[0].mxu0 %v118
    %v259 = vpop.f32.mrb[0].mxu0
    %v260 = vadd.f32 %v73, %v259
    %v261 = vpop.f32.mrb[0].mxu0
    %262 = vmatprep.mubr.f32.mxu0 0.0
    %263 = vmatmul.mubr.f32.gmra.mrb[0].mxu0 %v121
    %v264 = vpop.f32.mrb[0].mxu0
    %v265 = vadd.f32 %v73, %v264
    %v266 = vpop.f32.mrb[0].mxu0
    %267 = vdwg.mxu0
    %v268 = vtanh.pop %v190
    %v269 = vtanh.pop %v195
    %v270 = vtanh.pop %v200
    %v271 = vtanh.pop %v205
    %v272 = vtanh.pop %v210
    %v273 = vtanh.pop %v215
    %v274 = vtanh.pop %v220
    %v275 = vtanh.pop %v225
    %v276 = vtanh.pop %v230
    %v277 = vtanh.pop %v235
    %v278 = vtanh.pop %v240
    %v279 = vtanh.pop %v245
    %v280 = vtanh.pop %v250
    %v281 = vtanh.pop %v255
    %v282 = vtanh.pop %v260
    %v283 = vtanh.pop %v265
    %v284 = vlaneseq
    %v285 = vshrl.u32 %v284, 7
    %v286 = vsub.s32 0, %v285
    %v287 = vrot.slane %v51, %v286
    %288 = vmatprep.subr.mxu0 0.0
    %289 = vmatpush1.msra.mxu0 %v35
    %290 = vmatprep.subr.mxu0 0.0
    %291 = vmatpush1.msra.mxu0 %v36
    %292 = vmatprep.subr.mxu0 0.0
    %293 = vmatpush1.msra.mxu0 %v37
    %294 = vmatprep.subr.mxu0 0.0
    %295 = vmatpush1.msra.mxu0 %v38
    %296 = vmatprep.subr.mxu0 0.0
    %297 = vmatpush1.msra.mxu0 %v39
    %298 = vmatprep.subr.mxu0 0.0
    %299 = vmatpush1.msra.mxu0 %v40
    %300 = vmatprep.subr.mxu0 0.0
    %301 = vmatpush1.msra.mxu0 %v41
    %302 = vmatprep.subr.mxu0 0.0
    %303 = vmatpush1.msra.mxu0 %v42
    %304 = vmatprep.subr.mxu0 0.0
    %305 = vmatpush1.msra.mxu0 %v43
    %306 = vmatprep.subr.mxu0 0.0
    %307 = vmatpush1.msra.mxu0 %v44
    %308 = vmatprep.subr.mxu0 0.0
    %309 = vmatpush1.msra.mxu0 %v45
    %310 = vmatprep.subr.mxu0 0.0
    %311 = vmatpush1.msra.mxu0 %v46
    %312 = vmatprep.subr.mxu0 0.0
    %313 = vmatpush1.msra.mxu0 %v47
    %314 = vmatprep.subr.mxu0 0.0
    %315 = vmatpush1.msra.mxu0 %v48
    %316 = vmatprep.subr.mxu0 0.0
    %317 = vmatpush1.msra.mxu0 %v49
    %318 = vmatprep.subr.mxu0 0.0
    %319 = vmatpush1.msra.mxu0 %v50
    %320 = vmatprep.subr.mxu0 0.0
    %321 = vmatpush1.msra.mxu0 0.0
    %322 = vmatprep.subr.mxu0 0.0
    %323 = vmatpush1.msra.mxu0 0.0
    %324 = vmatprep.subr.mxu0 0.0
    %325 = vmatpush1.msra.mxu0 0.0
    %326 = vmatprep.subr.mxu0 0.0
    %327 = vmatpush1.msra.mxu0 0.0
    %328 = vmatprep.subr.mxu0 0.0
    %329 = vmatpush1.msra.mxu0 0.0
    %330 = vmatprep.subr.mxu0 0.0
    %331 = vmatpush1.msra.mxu0 0.0
    %332 = vmatprep.subr.mxu0 0.0
    %333 = vmatpush1.msra.mxu0 0.0
    %334 = vmatprep.subr.mxu0 0.0
    %335 = vmatpush1.msra.mxu0 0.0
    %336 = vmatprep.subr.mxu0 0.0
    %337 = vmatpush1.msra.mxu0 0.0
    %338 = vmatprep.subr.mxu0 0.0
    %339 = vmatpush1.msra.mxu0 0.0
    %340 = vmatprep.subr.mxu0 0.0
    %341 = vmatpush1.msra.mxu0 0.0
    %342 = vmatprep.subr.mxu0 0.0
    %343 = vmatpush1.msra.mxu0 0.0
    %344 = vmatprep.subr.mxu0 0.0
    %345 = vmatpush1.msra.mxu0 0.0
    %346 = vmatprep.subr.mxu0 0.0
    %347 = vmatpush1.msra.mxu0 0.0
    %348 = vmatprep.subr.mxu0 0.0
    %349 = vmatpush1.msra.mxu0 0.0
    %350 = vmatprep.subr.mxu0 0.0
    %351 = vmatpush1.msra.mxu0 0.0
    %352 = vmatprep.mubr.f32.mxu0 0.0
    %353 = vmatmul.mubr.f32.gmra.mrb[0].mxu0 %v268
    %v354 = vpop.f32.mrb[0].mxu0
    %v355 = vadd.f32 %v287, %v354
    %v356 = vpop.f32.mrb[0].mxu0
    %357 = vmatprep.mubr.f32.mxu0 0.0
    %358 = vmatmul.mubr.f32.gmra.mrb[0].mxu0 %v269
    %v359 = vpop.f32.mrb[0].mxu0
    %v360 = vadd.f32 %v287, %v359
    %v361 = vpop.f32.mrb[0].mxu0
    %362 = vmatprep.mubr.f32.mxu0 0.0
    %363 = vmatmul.mubr.f32.gmra.mrb[0].mxu0 %v270
    %v364 = vpop.f32.mrb[0].mxu0
    %v365 = vadd.f32 %v287, %v364
    %v366 = vpop.f32.mrb[0].mxu0
    %367 = vmatprep.mubr.f32.mxu0 0.0
    %368 = vmatmul.mubr.f32.gmra.mrb[0].mxu0 %v271
    %v369 = vpop.f32.mrb[0].mxu0
    %v370 = vadd.f32 %v287, %v369
    %v371 = vpop.f32.mrb[0].mxu0
    %372 = vmatprep.mubr.f32.mxu0 0.0
    %373 = vmatmul.mubr.f32.gmra.mrb[0].mxu0 %v272
    %v374 = vpop.f32.mrb[0].mxu0
    %v375 = vadd.f32 %v287, %v374
    %v376 = vpop.f32.mrb[0].mxu0
    %377 = vmatprep.mubr.f32.mxu0 0.0
    %378 = vmatmul.mubr.f32.gmra.mrb[0].mxu0 %v273
    %v379 = vpop.f32.mrb[0].mxu0
    %v380 = vadd.f32 %v287, %v379
    %v381 = vpop.f32.mrb[0].mxu0
    %382 = vmatprep.mubr.f32.mxu0 0.0
    %383 = vmatmul.mubr.f32.gmra.mrb[0].mxu0 %v274
    %v384 = vpop.f32.mrb[0].mxu0
    %v385 = vadd.f32 %v287, %v384
    %v386 = vpop.f32.mrb[0].mxu0
    %387 = vmatprep.mubr.f32.mxu0 0.0
    %388 = vmatmul.mubr.f32.gmra.mrb[0].mxu0 %v275
    %v389 = vpop.f32.mrb[0].mxu0
    %v390 = vadd.f32 %v287, %v389
    %v391 = vpop.f32.mrb[0].mxu0
    %392 = vmatprep.mubr.f32.mxu0 0.0
    %393 = vmatmul.mubr.f32.gmra.mrb[0].mxu0 %v276
    %v394 = vpop.f32.mrb[0].mxu0
    %v395 = vadd.f32 %v287, %v394
    %v396 = vpop.f32.mrb[0].mxu0
    %397 = vmatprep.mubr.f32.mxu0 0.0
    %398 = vmatmul.mubr.f32.gmra.mrb[0].mxu0 %v277
    %v399 = vpop.f32.mrb[0].mxu0
    %v400 = vadd.f32 %v287, %v399
    %v401 = vpop.f32.mrb[0].mxu0
    %402 = vmatprep.mubr.f32.mxu0 0.0
    %403 = vmatmul.mubr.f32.gmra.mrb[0].mxu0 %v278
    %v404 = vpop.f32.mrb[0].mxu0
    %v405 = vadd.f32 %v287, %v404
    %v406 = vpop.f32.mrb[0].mxu0
    %407 = vmatprep.mubr.f32.mxu0 0.0
    %408 = vmatmul.mubr.f32.gmra.mrb[0].mxu0 %v279
    %v409 = vpop.f32.mrb[0].mxu0
    %v410 = vadd.f32 %v287, %v409
    %v411 = vpop.f32.mrb[0].mxu0
    %412 = vmatprep.mubr.f32.mxu0 0.0
    %413 = vmatmul.mubr.f32.gmra.mrb[0].mxu0 %v280
    %v414 = vpop.f32.mrb[0].mxu0
    %v415 = vadd.f32 %v287, %v414
    %v416 = vpop.f32.mrb[0].mxu0
    %417 = vmatprep.mubr.f32.mxu0 0.0
    %418 = vmatmul.mubr.f32.gmra.mrb[0].mxu0 %v281
    %v419 = vpop.f32.mrb[0].mxu0
    %v420 = vadd.f32 %v287, %v419
    %v421 = vpop.f32.mrb[0].mxu0
    %422 = vmatprep.mubr.f32.mxu0 0.0
    %423 = vmatmul.mubr.f32.gmra.mrb[0].mxu0 %v282
    %v424 = vpop.f32.mrb[0].mxu0
    %v425 = vadd.f32 %v287, %v424
    %v426 = vpop.f32.mrb[0].mxu0
    %427 = vmatprep.mubr.f32.mxu0 0.0
    %428 = vmatmul.mubr.f32.gmra.mrb[0].mxu0 %v283
    %v429 = vpop.f32.mrb[0].mxu0
    %v430 = vadd.f32 %v287, %v429
    %v431 = vpop.f32.mrb[0].mxu0
    %432 = vdwg.mxu0
    %v433 = vlaneseq
    %v434 = vand.u32 %v433, 127
    %435 = vrot.lane.b32.xlu0 %v355, 120
    %v436 = vpop.permute.xlu0 %435
    %437 = vrot.lane.b32.xlu0 %v360, 120
    %v438 = vpop.permute.xlu0 %437
    %439 = vrot.lane.b32.xlu0 %v365, 120
    %v440 = vpop.permute.xlu0 %439
    %441 = vrot.lane.b32.xlu0 %v370, 120
    %v442 = vpop.permute.xlu0 %441
    %443 = vrot.lane.b32.xlu0 %v375, 120
    %v444 = vpop.permute.xlu0 %443
    %445 = vrot.lane.b32.xlu0 %v380, 120
    %v446 = vpop.permute.xlu0 %445
    %447 = vrot.lane.b32.xlu0 %v385, 120
    %v448 = vpop.permute.xlu0 %447
    %449 = vrot.lane.b32.xlu0 %v390, 120
    %v450 = vpop.permute.xlu0 %449
    %451 = vrot.lane.b32.xlu0 %v395, 120
    %v452 = vpop.permute.xlu0 %451
    %453 = vrot.lane.b32.xlu0 %v400, 120
    %v454 = vpop.permute.xlu0 %453
    %455 = vrot.lane.b32.xlu0 %v405, 120
    %v456 = vpop.permute.xlu0 %455
    %457 = vrot.lane.b32.xlu0 %v410, 120
    %v458 = vpop.permute.xlu0 %457
    %459 = vrot.lane.b32.xlu0 %v415, 120
    %v460 = vpop.permute.xlu0 %459
    %461 = vrot.lane.b32.xlu0 %v420, 120
    %v462 = vpop.permute.xlu0 %461
    %463 = vrot.lane.b32.xlu0 %v425, 120
    %v464 = vpop.permute.xlu0 %463
    %465 = vrot.lane.b32.xlu0 %v430, 120
    %v466 = vpop.permute.xlu0 %465
    %v467 = vmax.f32 %v436, -11.512916
    %v468 = vmax.f32 %v438, -11.512916
    %v469 = vmax.f32 %v440, -11.512916
    %v470 = vmax.f32 %v442, -11.512916
    %v471 = vmax.f32 %v444, -11.512916
    %v472 = vmax.f32 %v446, -11.512916
    %v473 = vmax.f32 %v448, -11.512916
    %v474 = vmax.f32 %v450, -11.512916
    %v475 = vmax.f32 %v452, -11.512916
    %v476 = vmax.f32 %v454, -11.512916
    %v477 = vmax.f32 %v456, -11.512916
    %v478 = vmax.f32 %v458, -11.512916
    %v479 = vmax.f32 %v460, -11.512916
    %v480 = vmax.f32 %v462, -11.512916
    %v481 = vmax.f32 %v464, -11.512916
    %v482 = vmax.f32 %v466, -11.512916
    %v483 = vmin.f32 %v467, 11.512916
    %v484 = vmin.f32 %v468, 11.512916
    %v485 = vmin.f32 %v469, 11.512916
    %v486 = vmin.f32 %v470, 11.512916
    %v487 = vmin.f32 %v471, 11.512916
    %v488 = vmin.f32 %v472, 11.512916
    %v489 = vmin.f32 %v473, 11.512916
    %v490 = vmin.f32 %v474, 11.512916
    %v491 = vmin.f32 %v475, 11.512916
    %v492 = vmin.f32 %v476, 11.512916
    %v493 = vmin.f32 %v477, 11.512916
    %v494 = vmin.f32 %v478, 11.512916
    %v495 = vmin.f32 %v479, 11.512916
    %v496 = vmin.f32 %v480, 11.512916
    %v497 = vmin.f32 %v481, 11.512916
    %v498 = vmin.f32 %v482, 11.512916
    %v499 = vsub.s32 %v434, 8
    %vm500 = vcmp.eq.s32.totalorder %v499, 0
    %vm501 = vcmp.eq.s32.totalorder %v499, 1
    %vm502 = vmor %vm500, %vm501
    %vm503 = vcmp.eq.s32.totalorder %v499, 4
    %vm504 = vmor %vm502, %vm503
    %vm505 = vcmp.eq.s32.totalorder %v499, 2
    %vm506 = vcmp.eq.s32.totalorder %v499, 3
    %vm507 = vmor %vm505, %vm506
    %vm508 = vcmp.eq.s32.totalorder %v499, 5
    %vm509 = vmor %vm507, %vm508
    %v510 = vadd.f32 %v355, %v483
    %v511 = vadd.f32 %v360, %v484
    %v512 = vadd.f32 %v365, %v485
    %v513 = vadd.f32 %v370, %v486
    %v514 = vadd.f32 %v375, %v487
    %v515 = vadd.f32 %v380, %v488
    %v516 = vadd.f32 %v385, %v489
    %v517 = vadd.f32 %v390, %v490
    %v518 = vadd.f32 %v395, %v491
    %v519 = vadd.f32 %v400, %v492
    %v520 = vadd.f32 %v405, %v493
    %v521 = vadd.f32 %v410, %v494
    %v522 = vadd.f32 %v415, %v495
    %v523 = vadd.f32 %v420, %v496
    %v524 = vadd.f32 %v425, %v497
    %v525 = vadd.f32 %v430, %v498
    %v526 = vmul.f32 %v510, 0.5
    %v527 = vmul.f32 %v511, 0.5
    %v528 = vmul.f32 %v512, 0.5
    %v529 = vmul.f32 %v513, 0.5
    %v530 = vmul.f32 %v514, 0.5
    %v531 = vmul.f32 %v515, 0.5
    %v532 = vmul.f32 %v516, 0.5
    %v533 = vmul.f32 %v517, 0.5
    %v534 = vmul.f32 %v518, 0.5
    %v535 = vmul.f32 %v519, 0.5
    %v536 = vmul.f32 %v520, 0.5
    %v537 = vmul.f32 %v521, 0.5
    %v538 = vmul.f32 %v522, 0.5
    %v539 = vmul.f32 %v523, 0.5
    %v540 = vmul.f32 %v524, 0.5
    %v541 = vmul.f32 %v525, 0.5
    %v542 = vtanh.pop %v526
    %v543 = vtanh.pop %v527
    %v544 = vtanh.pop %v528
    %v545 = vtanh.pop %v529
    %v546 = vtanh.pop %v530
    %v547 = vtanh.pop %v531
    %v548 = vtanh.pop %v532
    %v549 = vtanh.pop %v533
    %v550 = vtanh.pop %v534
    %v551 = vtanh.pop %v535
    %v552 = vtanh.pop %v536
    %v553 = vtanh.pop %v537
    %v554 = vtanh.pop %v538
    %v555 = vtanh.pop %v539
    %v556 = vtanh.pop %v540
    %v557 = vtanh.pop %v541
    %v558 = vadd.f32 %v542, 1.0
    %v559 = vadd.f32 %v543, 1.0
    %v560 = vadd.f32 %v544, 1.0
    %v561 = vadd.f32 %v545, 1.0
    %v562 = vadd.f32 %v546, 1.0
    %v563 = vadd.f32 %v547, 1.0
    %v564 = vadd.f32 %v548, 1.0
    %v565 = vadd.f32 %v549, 1.0
    %v566 = vadd.f32 %v550, 1.0
    %v567 = vadd.f32 %v551, 1.0
    %v568 = vadd.f32 %v552, 1.0
    %v569 = vadd.f32 %v553, 1.0
    %v570 = vadd.f32 %v554, 1.0
    %v571 = vadd.f32 %v555, 1.0
    %v572 = vadd.f32 %v556, 1.0
    %v573 = vadd.f32 %v557, 1.0
    %v574 = vmul.f32 %v558, 0.5
    %v575 = vmul.f32 %v559, 0.5
    %v576 = vmul.f32 %v560, 0.5
    %v577 = vmul.f32 %v561, 0.5
    %v578 = vmul.f32 %v562, 0.5
    %v579 = vmul.f32 %v563, 0.5
    %v580 = vmul.f32 %v564, 0.5
    %v581 = vmul.f32 %v565, 0.5
    %v582 = vmul.f32 %v566, 0.5
    %v583 = vmul.f32 %v567, 0.5
    %v584 = vmul.f32 %v568, 0.5
    %v585 = vmul.f32 %v569, 0.5
    %v586 = vmul.f32 %v570, 0.5
    %v587 = vmul.f32 %v571, 0.5
    %v588 = vmul.f32 %v572, 0.5
    %v589 = vmul.f32 %v573, 0.5
    %v590 = vmul.f32 %v355, 1.442695
    %v591 = vpow.pop %v590
    %v592 = vmul.f32 %v360, 1.442695
    %v593 = vpow.pop %v592
    %v594 = vmul.f32 %v365, 1.442695
    %v595 = vpow.pop %v594
    %v596 = vmul.f32 %v370, 1.442695
    %v597 = vpow.pop %v596
    %v598 = vmul.f32 %v375, 1.442695
    %v599 = vpow.pop %v598
    %v600 = vmul.f32 %v380, 1.442695
    %v601 = vpow.pop %v600
    %v602 = vmul.f32 %v385, 1.442695
    %v603 = vpow.pop %v602
    %v604 = vmul.f32 %v390, 1.442695
    %v605 = vpow.pop %v604
    %v606 = vmul.f32 %v395, 1.442695
    %v607 = vpow.pop %v606
    %v608 = vmul.f32 %v400, 1.442695
    %v609 = vpow.pop %v608
    %v610 = vmul.f32 %v405, 1.442695
    %v611 = vpow.pop %v610
    %v612 = vmul.f32 %v410, 1.442695
    %v613 = vpow.pop %v612
    %v614 = vmul.f32 %v415, 1.442695
    %v615 = vpow.pop %v614
    %v616 = vmul.f32 %v420, 1.442695
    %v617 = vpow.pop %v616
    %v618 = vmul.f32 %v425, 1.442695
    %v619 = vpow.pop %v618
    %v620 = vmul.f32 %v430, 1.442695
    %v621 = vpow.pop %v620
    %v622 = vsel %vm509, %v591, %v355
    %v623 = vsel %vm509, %v593, %v360
    %v624 = vsel %vm509, %v595, %v365
    %v625 = vsel %vm509, %v597, %v370
    %v626 = vsel %vm509, %v599, %v375
    %v627 = vsel %vm509, %v601, %v380
    %v628 = vsel %vm509, %v603, %v385
    %v629 = vsel %vm509, %v605, %v390
    %v630 = vsel %vm509, %v607, %v395
    %v631 = vsel %vm509, %v609, %v400
    %v632 = vsel %vm509, %v611, %v405
    %v633 = vsel %vm509, %v613, %v410
    %v634 = vsel %vm509, %v615, %v415
    %v635 = vsel %vm509, %v617, %v420
    %v636 = vsel %vm509, %v619, %v425
    %v637 = vsel %vm509, %v621, %v430
    %v638 = vsel %vm504, %v574, %v622
    %v639 = vsel %vm504, %v575, %v623
    %v640 = vsel %vm504, %v576, %v624
    %v641 = vsel %vm504, %v577, %v625
    %v642 = vsel %vm504, %v578, %v626
    %v643 = vsel %vm504, %v579, %v627
    %v644 = vsel %vm504, %v580, %v628
    %v645 = vsel %vm504, %v581, %v629
    %v646 = vsel %vm504, %v582, %v630
    %v647 = vsel %vm504, %v583, %v631
    %v648 = vsel %vm504, %v584, %v632
    %v649 = vsel %vm504, %v585, %v633
    %v650 = vsel %vm504, %v586, %v634
    %v651 = vsel %vm504, %v587, %v635
    %v652 = vsel %vm504, %v588, %v636
    %v653 = vsel %vm504, %v589, %v637
    %vm654 = vcmp.lt.s32.totalorder %v434, 8
    %v655 = vsel %vm654, %v355, -1e+30
    %v656 = vsel %vm654, %v360, -1e+30
    %v657 = vsel %vm654, %v365, -1e+30
    %v658 = vsel %vm654, %v370, -1e+30
    %v659 = vsel %vm654, %v375, -1e+30
    %v660 = vsel %vm654, %v380, -1e+30
    %v661 = vsel %vm654, %v385, -1e+30
    %v662 = vsel %vm654, %v390, -1e+30
    %v663 = vsel %vm654, %v395, -1e+30
    %v664 = vsel %vm654, %v400, -1e+30
    %v665 = vsel %vm654, %v405, -1e+30
    %v666 = vsel %vm654, %v410, -1e+30
    %v667 = vsel %vm654, %v415, -1e+30
    %v668 = vsel %vm654, %v420, -1e+30
    %v669 = vsel %vm654, %v425, -1e+30
    %v670 = vsel %vm654, %v430, -1e+30
    %671 = vmax.xlane.f32.xlu0 %v655
    %v672 = vpop.xlane.xlu0 %671
    %673 = vmax.xlane.f32.xlu0 %v656
    %v674 = vpop.xlane.xlu0 %673
    %675 = vmax.xlane.f32.xlu0 %v657
    %v676 = vpop.xlane.xlu0 %675
    %677 = vmax.xlane.f32.xlu0 %v658
    %v678 = vpop.xlane.xlu0 %677
    %679 = vmax.xlane.f32.xlu0 %v659
    %v680 = vpop.xlane.xlu0 %679
    %681 = vmax.xlane.f32.xlu0 %v660
    %v682 = vpop.xlane.xlu0 %681
    %683 = vmax.xlane.f32.xlu0 %v661
    %v684 = vpop.xlane.xlu0 %683
    %685 = vmax.xlane.f32.xlu0 %v662
    %v686 = vpop.xlane.xlu0 %685
    %687 = vmax.xlane.f32.xlu0 %v663
    %v688 = vpop.xlane.xlu0 %687
    %689 = vmax.xlane.f32.xlu0 %v664
    %v690 = vpop.xlane.xlu0 %689
    %691 = vmax.xlane.f32.xlu0 %v665
    %v692 = vpop.xlane.xlu0 %691
    %693 = vmax.xlane.f32.xlu0 %v666
    %v694 = vpop.xlane.xlu0 %693
    %695 = vmax.xlane.f32.xlu0 %v667
    %v696 = vpop.xlane.xlu0 %695
    %697 = vmax.xlane.f32.xlu0 %v668
    %v698 = vpop.xlane.xlu0 %697
    %699 = vmax.xlane.f32.xlu0 %v669
    %v700 = vpop.xlane.xlu0 %699
    %701 = vmax.xlane.f32.xlu0 %v670
    %v702 = vpop.xlane.xlu0 %701
    %v703 = vmul.f32 %v672, 0.5
    %v704 = vmul.f32 %v674, 0.5
    %v705 = vmul.f32 %v676, 0.5
    %v706 = vmul.f32 %v678, 0.5
    %v707 = vmul.f32 %v680, 0.5
    %v708 = vmul.f32 %v682, 0.5
    %v709 = vmul.f32 %v684, 0.5
    %v710 = vmul.f32 %v686, 0.5
    %v711 = vmul.f32 %v688, 0.5
    %v712 = vmul.f32 %v690, 0.5
    %v713 = vmul.f32 %v692, 0.5
    %v714 = vmul.f32 %v694, 0.5
    %v715 = vmul.f32 %v696, 0.5
    %v716 = vmul.f32 %v698, 0.5
    %v717 = vmul.f32 %v700, 0.5
    %v718 = vmul.f32 %v702, 0.5
    %v719 = vtanh.pop %v703
    %v720 = vtanh.pop %v704
    %v721 = vtanh.pop %v705
    %v722 = vtanh.pop %v706
    %v723 = vtanh.pop %v707
    %v724 = vtanh.pop %v708
    %v725 = vtanh.pop %v709
    %v726 = vtanh.pop %v710
    %v727 = vtanh.pop %v711
    %v728 = vtanh.pop %v712
    %v729 = vtanh.pop %v713
    %v730 = vtanh.pop %v714
    %v731 = vtanh.pop %v715
    %v732 = vtanh.pop %v716
    %v733 = vtanh.pop %v717
    %v734 = vtanh.pop %v718
    %v735 = vadd.f32 %v719, 1.0
    %v736 = vadd.f32 %v720, 1.0
    %v737 = vadd.f32 %v721, 1.0
    %v738 = vadd.f32 %v722, 1.0
    %v739 = vadd.f32 %v723, 1.0
    %v740 = vadd.f32 %v724, 1.0
    %v741 = vadd.f32 %v725, 1.0
    %v742 = vadd.f32 %v726, 1.0
    %v743 = vadd.f32 %v727, 1.0
    %v744 = vadd.f32 %v728, 1.0
    %v745 = vadd.f32 %v729, 1.0
    %v746 = vadd.f32 %v730, 1.0
    %v747 = vadd.f32 %v731, 1.0
    %v748 = vadd.f32 %v732, 1.0
    %v749 = vadd.f32 %v733, 1.0
    %v750 = vadd.f32 %v734, 1.0
    %v751 = vmul.f32 %v735, 0.5
    %v752 = vmul.f32 %v736, 0.5
    %v753 = vmul.f32 %v737, 0.5
    %v754 = vmul.f32 %v738, 0.5
    %v755 = vmul.f32 %v739, 0.5
    %v756 = vmul.f32 %v740, 0.5
    %v757 = vmul.f32 %v741, 0.5
    %v758 = vmul.f32 %v742, 0.5
    %v759 = vmul.f32 %v743, 0.5
    %v760 = vmul.f32 %v744, 0.5
    %v761 = vmul.f32 %v745, 0.5
    %v762 = vmul.f32 %v746, 0.5
    %v763 = vmul.f32 %v747, 0.5
    %v764 = vmul.f32 %v748, 0.5
    %v765 = vmul.f32 %v749, 0.5
    %v766 = vmul.f32 %v750, 0.5
    %vm767 = vcmp.ge.f32.partialorder %v655, %v672
    %vm768 = vcmp.ge.f32.partialorder %v656, %v674
    %vm769 = vcmp.ge.f32.partialorder %v657, %v676
    %vm770 = vcmp.ge.f32.partialorder %v658, %v678
    %vm771 = vcmp.ge.f32.partialorder %v659, %v680
    %vm772 = vcmp.ge.f32.partialorder %v660, %v682
    %vm773 = vcmp.ge.f32.partialorder %v661, %v684
    %vm774 = vcmp.ge.f32.partialorder %v662, %v686
    %vm775 = vcmp.ge.f32.partialorder %v663, %v688
    %vm776 = vcmp.ge.f32.partialorder %v664, %v690
    %vm777 = vcmp.ge.f32.partialorder %v665, %v692
    %vm778 = vcmp.ge.f32.partialorder %v666, %v694
    %vm779 = vcmp.ge.f32.partialorder %v667, %v696
    %vm780 = vcmp.ge.f32.partialorder %v668, %v698
    %vm781 = vcmp.ge.f32.partialorder %v669, %v700
    %vm782 = vcmp.ge.f32.partialorder %v670, %v702
    %v783 = vsel %vm767, %v434, 8
    %v784 = vsel %vm768, %v434, 8
    %v785 = vsel %vm769, %v434, 8
    %v786 = vsel %vm770, %v434, 8
    %v787 = vsel %vm771, %v434, 8
    %v788 = vsel %vm772, %v434, 8
    %v789 = vsel %vm773, %v434, 8
    %v790 = vsel %vm774, %v434, 8
    %v791 = vsel %vm775, %v434, 8
    %v792 = vsel %vm776, %v434, 8
    %v793 = vsel %vm777, %v434, 8
    %v794 = vsel %vm778, %v434, 8
    %v795 = vsel %vm779, %v434, 8
    %v796 = vsel %vm780, %v434, 8
    %v797 = vsel %vm781, %v434, 8
    %v798 = vsel %vm782, %v434, 8
    %v799 = vand.u32 %v783, 65535
    %v800 = vshra.s32 %v783, 16
    %v801 = vcvt.s32.f32 %v799
    %v802 = vcvt.s32.f32 %v800
    %803 = vmin.xlane.f32.xlu0 %v802
    %v804 = vpop.xlane.xlu0 %803
    %vm805 = vcmp.eq.f32.partialorder %v802, %v804
    %v806 = vsel %vm805, %v801, inf
    %807 = vmin.xlane.f32.xlu0 %v806
    %v808 = vpop.xlane.xlu0 %807
    %v809 = vcvt.f32.s32 %v808
    %v810 = vcvt.f32.s32 %v804
    %v811 = vshll.u32 %v810, 16
    %v812 = vadd.s32 %v811, %v809
    %v813 = vand.u32 %v784, 65535
    %v814 = vshra.s32 %v784, 16
    %v815 = vcvt.s32.f32 %v813
    %v816 = vcvt.s32.f32 %v814
    %817 = vmin.xlane.f32.xlu0 %v816
    %v818 = vpop.xlane.xlu0 %817
    %vm819 = vcmp.eq.f32.partialorder %v816, %v818
    %v820 = vsel %vm819, %v815, inf
    %821 = vmin.xlane.f32.xlu0 %v820
    %v822 = vpop.xlane.xlu0 %821
    %v823 = vcvt.f32.s32 %v822
    %v824 = vcvt.f32.s32 %v818
    %v825 = vshll.u32 %v824, 16
    %v826 = vadd.s32 %v825, %v823
    %v827 = vand.u32 %v785, 65535
    %v828 = vshra.s32 %v785, 16
    %v829 = vcvt.s32.f32 %v827
    %v830 = vcvt.s32.f32 %v828
    %831 = vmin.xlane.f32.xlu0 %v830
    %v832 = vpop.xlane.xlu0 %831
    %vm833 = vcmp.eq.f32.partialorder %v830, %v832
    %v834 = vsel %vm833, %v829, inf
    %835 = vmin.xlane.f32.xlu0 %v834
    %v836 = vpop.xlane.xlu0 %835
    %v837 = vcvt.f32.s32 %v836
    %v838 = vcvt.f32.s32 %v832
    %v839 = vshll.u32 %v838, 16
    %v840 = vadd.s32 %v839, %v837
    %v841 = vand.u32 %v786, 65535
    %v842 = vshra.s32 %v786, 16
    %v843 = vcvt.s32.f32 %v841
    %v844 = vcvt.s32.f32 %v842
    %845 = vmin.xlane.f32.xlu0 %v844
    %v846 = vpop.xlane.xlu0 %845
    %vm847 = vcmp.eq.f32.partialorder %v844, %v846
    %v848 = vsel %vm847, %v843, inf
    %849 = vmin.xlane.f32.xlu0 %v848
    %v850 = vpop.xlane.xlu0 %849
    %v851 = vcvt.f32.s32 %v850
    %v852 = vcvt.f32.s32 %v846
    %v853 = vshll.u32 %v852, 16
    %v854 = vadd.s32 %v853, %v851
    %v855 = vand.u32 %v787, 65535
    %v856 = vshra.s32 %v787, 16
    %v857 = vcvt.s32.f32 %v855
    %v858 = vcvt.s32.f32 %v856
    %859 = vmin.xlane.f32.xlu0 %v858
    %v860 = vpop.xlane.xlu0 %859
    %vm861 = vcmp.eq.f32.partialorder %v858, %v860
    %v862 = vsel %vm861, %v857, inf
    %863 = vmin.xlane.f32.xlu0 %v862
    %v864 = vpop.xlane.xlu0 %863
    %v865 = vcvt.f32.s32 %v864
    %v866 = vcvt.f32.s32 %v860
    %v867 = vshll.u32 %v866, 16
    %v868 = vadd.s32 %v867, %v865
    %v869 = vand.u32 %v788, 65535
    %v870 = vshra.s32 %v788, 16
    %v871 = vcvt.s32.f32 %v869
    %v872 = vcvt.s32.f32 %v870
    %873 = vmin.xlane.f32.xlu0 %v872
    %v874 = vpop.xlane.xlu0 %873
    %vm875 = vcmp.eq.f32.partialorder %v872, %v874
    %v876 = vsel %vm875, %v871, inf
    %877 = vmin.xlane.f32.xlu0 %v876
    %v878 = vpop.xlane.xlu0 %877
    %v879 = vcvt.f32.s32 %v878
    %v880 = vcvt.f32.s32 %v874
    %v881 = vshll.u32 %v880, 16
    %v882 = vadd.s32 %v881, %v879
    %v883 = vand.u32 %v789, 65535
    %v884 = vshra.s32 %v789, 16
    %v885 = vcvt.s32.f32 %v883
    %v886 = vcvt.s32.f32 %v884
    %887 = vmin.xlane.f32.xlu0 %v886
    %v888 = vpop.xlane.xlu0 %887
    %vm889 = vcmp.eq.f32.partialorder %v886, %v888
    %v890 = vsel %vm889, %v885, inf
    %891 = vmin.xlane.f32.xlu0 %v890
    %v892 = vpop.xlane.xlu0 %891
    %v893 = vcvt.f32.s32 %v892
    %v894 = vcvt.f32.s32 %v888
    %v895 = vshll.u32 %v894, 16
    %v896 = vadd.s32 %v895, %v893
    %v897 = vand.u32 %v790, 65535
    %v898 = vshra.s32 %v790, 16
    %v899 = vcvt.s32.f32 %v897
    %v900 = vcvt.s32.f32 %v898
    %901 = vmin.xlane.f32.xlu0 %v900
    %v902 = vpop.xlane.xlu0 %901
    %vm903 = vcmp.eq.f32.partialorder %v900, %v902
    %v904 = vsel %vm903, %v899, inf
    %905 = vmin.xlane.f32.xlu0 %v904
    %v906 = vpop.xlane.xlu0 %905
    %v907 = vcvt.f32.s32 %v906
    %v908 = vcvt.f32.s32 %v902
    %v909 = vshll.u32 %v908, 16
    %v910 = vadd.s32 %v909, %v907
    %v911 = vand.u32 %v791, 65535
    %v912 = vshra.s32 %v791, 16
    %v913 = vcvt.s32.f32 %v911
    %v914 = vcvt.s32.f32 %v912
    %915 = vmin.xlane.f32.xlu0 %v914
    %v916 = vpop.xlane.xlu0 %915
    %vm917 = vcmp.eq.f32.partialorder %v914, %v916
    %v918 = vsel %vm917, %v913, inf
    %919 = vmin.xlane.f32.xlu0 %v918
    %v920 = vpop.xlane.xlu0 %919
    %v921 = vcvt.f32.s32 %v920
    %v922 = vcvt.f32.s32 %v916
    %v923 = vshll.u32 %v922, 16
    %v924 = vadd.s32 %v923, %v921
    %v925 = vand.u32 %v792, 65535
    %v926 = vshra.s32 %v792, 16
    %v927 = vcvt.s32.f32 %v925
    %v928 = vcvt.s32.f32 %v926
    %929 = vmin.xlane.f32.xlu0 %v928
    %v930 = vpop.xlane.xlu0 %929
    %vm931 = vcmp.eq.f32.partialorder %v928, %v930
    %v932 = vsel %vm931, %v927, inf
    %933 = vmin.xlane.f32.xlu0 %v932
    %v934 = vpop.xlane.xlu0 %933
    %v935 = vcvt.f32.s32 %v934
    %v936 = vcvt.f32.s32 %v930
    %v937 = vshll.u32 %v936, 16
    %v938 = vadd.s32 %v937, %v935
    %v939 = vand.u32 %v793, 65535
    %v940 = vshra.s32 %v793, 16
    %v941 = vcvt.s32.f32 %v939
    %v942 = vcvt.s32.f32 %v940
    %943 = vmin.xlane.f32.xlu0 %v942
    %v944 = vpop.xlane.xlu0 %943
    %vm945 = vcmp.eq.f32.partialorder %v942, %v944
    %v946 = vsel %vm945, %v941, inf
    %947 = vmin.xlane.f32.xlu0 %v946
    %v948 = vpop.xlane.xlu0 %947
    %v949 = vcvt.f32.s32 %v948
    %v950 = vcvt.f32.s32 %v944
    %v951 = vshll.u32 %v950, 16
    %v952 = vadd.s32 %v951, %v949
    %v953 = vand.u32 %v794, 65535
    %v954 = vshra.s32 %v794, 16
    %v955 = vcvt.s32.f32 %v953
    %v956 = vcvt.s32.f32 %v954
    %957 = vmin.xlane.f32.xlu0 %v956
    %v958 = vpop.xlane.xlu0 %957
    %vm959 = vcmp.eq.f32.partialorder %v956, %v958
    %v960 = vsel %vm959, %v955, inf
    %961 = vmin.xlane.f32.xlu0 %v960
    %v962 = vpop.xlane.xlu0 %961
    %v963 = vcvt.f32.s32 %v962
    %v964 = vcvt.f32.s32 %v958
    %v965 = vshll.u32 %v964, 16
    %v966 = vadd.s32 %v965, %v963
    %v967 = vand.u32 %v795, 65535
    %v968 = vshra.s32 %v795, 16
    %v969 = vcvt.s32.f32 %v967
    %v970 = vcvt.s32.f32 %v968
    %971 = vmin.xlane.f32.xlu0 %v970
    %v972 = vpop.xlane.xlu0 %971
    %vm973 = vcmp.eq.f32.partialorder %v970, %v972
    %v974 = vsel %vm973, %v969, inf
    %975 = vmin.xlane.f32.xlu0 %v974
    %v976 = vpop.xlane.xlu0 %975
    %v977 = vcvt.f32.s32 %v976
    %v978 = vcvt.f32.s32 %v972
    %v979 = vshll.u32 %v978, 16
    %v980 = vadd.s32 %v979, %v977
    %v981 = vand.u32 %v796, 65535
    %v982 = vshra.s32 %v796, 16
    %v983 = vcvt.s32.f32 %v981
    %v984 = vcvt.s32.f32 %v982
    %985 = vmin.xlane.f32.xlu0 %v984
    %v986 = vpop.xlane.xlu0 %985
    %vm987 = vcmp.eq.f32.partialorder %v984, %v986
    %v988 = vsel %vm987, %v983, inf
    %989 = vmin.xlane.f32.xlu0 %v988
    %v990 = vpop.xlane.xlu0 %989
    %v991 = vcvt.f32.s32 %v990
    %v992 = vcvt.f32.s32 %v986
    %v993 = vshll.u32 %v992, 16
    %v994 = vadd.s32 %v993, %v991
    %v995 = vand.u32 %v797, 65535
    %v996 = vshra.s32 %v797, 16
    %v997 = vcvt.s32.f32 %v995
    %v998 = vcvt.s32.f32 %v996
    %999 = vmin.xlane.f32.xlu0 %v998
    %v1000 = vpop.xlane.xlu0 %999
    %vm1001 = vcmp.eq.f32.partialorder %v998, %v1000
    %v1002 = vsel %vm1001, %v997, inf
    %1003 = vmin.xlane.f32.xlu0 %v1002
    %v1004 = vpop.xlane.xlu0 %1003
    %v1005 = vcvt.f32.s32 %v1004
    %v1006 = vcvt.f32.s32 %v1000
    %v1007 = vshll.u32 %v1006, 16
    %v1008 = vadd.s32 %v1007, %v1005
    %v1009 = vand.u32 %v798, 65535
    %v1010 = vshra.s32 %v798, 16
    %v1011 = vcvt.s32.f32 %v1009
    %v1012 = vcvt.s32.f32 %v1010
    %1013 = vmin.xlane.f32.xlu0 %v1012
    %v1014 = vpop.xlane.xlu0 %1013
    %vm1015 = vcmp.eq.f32.partialorder %v1012, %v1014
    %v1016 = vsel %vm1015, %v1011, inf
    %1017 = vmin.xlane.f32.xlu0 %v1016
    %v1018 = vpop.xlane.xlu0 %1017
    %v1019 = vcvt.f32.s32 %v1018
    %v1020 = vcvt.f32.s32 %v1014
    %v1021 = vshll.u32 %v1020, 16
    %v1022 = vadd.s32 %v1021, %v1019
    %vm1023 = vcmp.ge.s32.totalorder %v434, 8
    %vm1024 = vcmp.lt.s32.totalorder %v434, 16
    %vm1025 = vmand %vm1023, %vm1024
    %v1026 = vsel %vm1025, %v638, 0.0
    %v1027 = vsel %vm1025, %v639, 0.0
    %v1028 = vsel %vm1025, %v640, 0.0
    %v1029 = vsel %vm1025, %v641, 0.0
    %v1030 = vsel %vm1025, %v642, 0.0
    %v1031 = vsel %vm1025, %v643, 0.0
    %v1032 = vsel %vm1025, %v644, 0.0
    %v1033 = vsel %vm1025, %v645, 0.0
    %v1034 = vsel %vm1025, %v646, 0.0
    %v1035 = vsel %vm1025, %v647, 0.0
    %v1036 = vsel %vm1025, %v648, 0.0
    %v1037 = vsel %vm1025, %v649, 0.0
    %v1038 = vsel %vm1025, %v650, 0.0
    %v1039 = vsel %vm1025, %v651, 0.0
    %v1040 = vsel %vm1025, %v652, 0.0
    %v1041 = vsel %vm1025, %v653, 0.0
    %vm1042 = vcmp.eq.s32.totalorder %v434, 16
    %v1043 = vsel %vm1042, %v751, %v1026
    %v1044 = vsel %vm1042, %v752, %v1027
    %v1045 = vsel %vm1042, %v753, %v1028
    %v1046 = vsel %vm1042, %v754, %v1029
    %v1047 = vsel %vm1042, %v755, %v1030
    %v1048 = vsel %vm1042, %v756, %v1031
    %v1049 = vsel %vm1042, %v757, %v1032
    %v1050 = vsel %vm1042, %v758, %v1033
    %v1051 = vsel %vm1042, %v759, %v1034
    %v1052 = vsel %vm1042, %v760, %v1035
    %v1053 = vsel %vm1042, %v761, %v1036
    %v1054 = vsel %vm1042, %v762, %v1037
    %v1055 = vsel %vm1042, %v763, %v1038
    %v1056 = vsel %vm1042, %v764, %v1039
    %v1057 = vsel %vm1042, %v765, %v1040
    %v1058 = vsel %vm1042, %v766, %v1041
    %vm1059 = vcmp.eq.s32.totalorder %v434, 17
    %v1060 = vcvt.s32.f32 %v812
    %v1061 = vcvt.s32.f32 %v826
    %v1062 = vcvt.s32.f32 %v840
    %v1063 = vcvt.s32.f32 %v854
    %v1064 = vcvt.s32.f32 %v868
    %v1065 = vcvt.s32.f32 %v882
    %v1066 = vcvt.s32.f32 %v896
    %v1067 = vcvt.s32.f32 %v910
    %v1068 = vcvt.s32.f32 %v924
    %v1069 = vcvt.s32.f32 %v938
    %v1070 = vcvt.s32.f32 %v952
    %v1071 = vcvt.s32.f32 %v966
    %v1072 = vcvt.s32.f32 %v980
    %v1073 = vcvt.s32.f32 %v994
    %v1074 = vcvt.s32.f32 %v1008
    %v1075 = vcvt.s32.f32 %v1022
    %v1076 = vsel %vm1059, %v1060, %v1043
    %v1077 = vsel %vm1059, %v1061, %v1044
    %v1078 = vsel %vm1059, %v1062, %v1045
    %v1079 = vsel %vm1059, %v1063, %v1046
    %v1080 = vsel %vm1059, %v1064, %v1047
    %v1081 = vsel %vm1059, %v1065, %v1048
    %v1082 = vsel %vm1059, %v1066, %v1049
    %v1083 = vsel %vm1059, %v1067, %v1050
    %v1084 = vsel %vm1059, %v1068, %v1051
    %v1085 = vsel %vm1059, %v1069, %v1052
    %v1086 = vsel %vm1059, %v1070, %v1053
    %v1087 = vsel %vm1059, %v1071, %v1054
    %v1088 = vsel %vm1059, %v1072, %v1055
    %v1089 = vsel %vm1059, %v1073, %v1056
    %v1090 = vsel %vm1059, %v1074, %v1057
    %v1091 = vsel %vm1059, %v1075, %v1058
    %1092 = vst [vmem:[#allocation5] sm:$0xff] %v1076
    %1093 = vst [vmem:[#allocation5 + $0x8] sm:$0xff] %v1077
    %1094 = vst [vmem:[#allocation5 + $0x10] sm:$0xff] %v1078
    %1095 = vst [vmem:[#allocation5 + $0x18] sm:$0xff] %v1079
    %1096 = vst [vmem:[#allocation5 + $0x20] sm:$0xff] %v1080
    %1097 = vst [vmem:[#allocation5 + $0x28] sm:$0xff] %v1081
    %1098 = vst [vmem:[#allocation5 + $0x30] sm:$0xff] %v1082
    %1099 = vst [vmem:[#allocation5 + $0x38] sm:$0xff] %v1083
    %1100 = vst [vmem:[#allocation5 + $0x40] sm:$0xff] %v1084
    %1101 = vst [vmem:[#allocation5 + $0x48] sm:$0xff] %v1085
    %1102 = vst [vmem:[#allocation5 + $0x50] sm:$0xff] %v1086
    %1103 = vst [vmem:[#allocation5 + $0x58] sm:$0xff] %v1087
    %1104 = vst [vmem:[#allocation5 + $0x60] sm:$0xff] %v1088
    %1105 = vst [vmem:[#allocation5 + $0x68] sm:$0xff] %v1089
    %1106 = vst [vmem:[#allocation5 + $0x70] sm:$0xff] %v1090
    %1107 = vst [vmem:[#allocation5 + $0x78] sm:$0xff] %v1091
    %v1108 = vld [vmem:[%s2] sm:$0xff]
    %v1109 = vld [vmem:[%s2 + $0x8] sm:$0xff]
    %v1110 = vld [vmem:[%s2 + $0x10] sm:$0xff]
    %v1111 = vld [vmem:[%s2 + $0x18] sm:$0xff]
    %v1112 = vld [vmem:[%s2 + $0x20] sm:$0xff]
    %v1113 = vld [vmem:[%s2 + $0x28] sm:$0xff]
    %v1114 = vld [vmem:[%s2 + $0x30] sm:$0xff]
    %v1115 = vld [vmem:[%s2 + $0x38] sm:$0xff]
    %v1116 = vld [vmem:[%s2 + $0x40] sm:$0xff]
    %v1117 = vld [vmem:[%s2 + $0x48] sm:$0xff]
    %v1118 = vld [vmem:[%s2 + $0x50] sm:$0xff]
    %v1119 = vld [vmem:[%s2 + $0x58] sm:$0xff]
    %v1120 = vld [vmem:[%s2 + $0x60] sm:$0xff]
    %v1121 = vld [vmem:[%s2 + $0x68] sm:$0xff]
    %v1122 = vld [vmem:[%s2 + $0x70] sm:$0xff]
    %v1123 = vld [vmem:[%s2 + $0x78] sm:$0xff]
    %1124 = vmatprep.subr.mxu0 0.0
    %1125 = vmatpush1.msra.mxu0 %v1108
    %1126 = vmatprep.subr.mxu0 0.0
    %1127 = vmatpush1.msra.mxu0 %v1109
    %1128 = vmatprep.subr.mxu0 0.0
    %1129 = vmatpush1.msra.mxu0 %v1110
    %1130 = vmatprep.subr.mxu0 0.0
    %1131 = vmatpush1.msra.mxu0 %v1111
    %1132 = vmatprep.subr.mxu0 0.0
    %1133 = vmatpush1.msra.mxu0 %v1112
    %1134 = vmatprep.subr.mxu0 0.0
    %1135 = vmatpush1.msra.mxu0 %v1113
    %1136 = vmatprep.subr.mxu0 0.0
    %1137 = vmatpush1.msra.mxu0 %v1114
    %1138 = vmatprep.subr.mxu0 0.0
    %1139 = vmatpush1.msra.mxu0 %v1115
    %1140 = vmatprep.subr.mxu0 0.0
    %1141 = vmatpush1.msra.mxu0 %v1116
    %1142 = vmatprep.subr.mxu0 0.0
    %1143 = vmatpush1.msra.mxu0 %v1117
    %1144 = vmatprep.subr.mxu0 0.0
    %1145 = vmatpush1.msra.mxu0 %v1118
    %1146 = vmatprep.subr.mxu0 0.0
    %1147 = vmatpush1.msra.mxu0 %v1119
    %1148 = vmatprep.subr.mxu0 0.0
    %1149 = vmatpush1.msra.mxu0 %v1120
    %1150 = vmatprep.subr.mxu0 0.0
    %1151 = vmatpush1.msra.mxu0 %v1121
    %1152 = vmatprep.subr.mxu0 0.0
    %1153 = vmatpush1.msra.mxu0 %v1122
    %1154 = vmatprep.subr.mxu0 0.0
    %1155 = vmatpush1.msra.mxu0 %v1123
    %1156 = vmatprep.subr.mxu0 0.0
    %1157 = vmatpush1.msra.mxu0 0.0
    %1158 = vmatprep.subr.mxu0 0.0
    %1159 = vmatpush1.msra.mxu0 0.0
    %1160 = vmatprep.subr.mxu0 0.0
    %1161 = vmatpush1.msra.mxu0 0.0
    %1162 = vmatprep.subr.mxu0 0.0
    %1163 = vmatpush1.msra.mxu0 0.0
    %1164 = vmatprep.subr.mxu0 0.0
    %1165 = vmatpush1.msra.mxu0 0.0
    %1166 = vmatprep.subr.mxu0 0.0
    %1167 = vmatpush1.msra.mxu0 0.0
    %1168 = vmatprep.subr.mxu0 0.0
    %1169 = vmatpush1.msra.mxu0 0.0
    %1170 = vmatprep.subr.mxu0 0.0
    %1171 = vmatpush1.msra.mxu0 0.0
    %1172 = vmatprep.subr.mxu0 0.0
    %1173 = vmatpush1.msra.mxu0 0.0
    %1174 = vmatprep.subr.mxu0 0.0
    %1175 = vmatpush1.msra.mxu0 0.0
    %1176 = vmatprep.subr.mxu0 0.0
    %1177 = vmatpush1.msra.mxu0 0.0
    %1178 = vmatprep.subr.mxu0 0.0
    %1179 = vmatpush1.msra.mxu0 0.0
    %1180 = vmatprep.subr.mxu0 0.0
    %1181 = vmatpush1.msra.mxu0 0.0
    %1182 = vmatprep.subr.mxu0 0.0
    %1183 = vmatpush1.msra.mxu0 0.0
    %1184 = vmatprep.subr.mxu0 0.0
    %1185 = vmatpush1.msra.mxu0 0.0
    %1186 = vmatprep.subr.mxu0 0.0
    %1187 = vmatpush1.msra.mxu0 0.0
    %1188 = vmatprep.mubr.f32.mxu0 0.0
    %1189 = vmatmul.mubr.f32.gmra.mrb[0].mxu0 %v52
    %v1190 = vpop.f32.mrb[0].mxu0
    %v1191 = vadd.f32 0.0, %v1190
    %v1192 = vpop.f32.mrb[0].mxu0
    %1193 = vmatprep.mubr.f32.mxu0 0.0
    %1194 = vmatmul.mubr.f32.gmra.mrb[0].mxu0 %v53
    %v1195 = vpop.f32.mrb[0].mxu0
    %v1196 = vadd.f32 0.0, %v1195
    %v1197 = vpop.f32.mrb[0].mxu0
    %1198 = vdwg.mxu0
    %v1199 = vlaneseq
    %v1200 = vshrl.u32 %v1199, 7
    %v1201 = vadd.f32 %v268, %v269
    %v1202 = vadd.f32 %v1201, %v270
    %v1203 = vadd.f32 %v1202, %v271
    %v1204 = vadd.f32 %v1203, %v272
    %v1205 = vadd.f32 %v1204, %v273
    %v1206 = vadd.f32 %v1205, %v274
    %v1207 = vadd.f32 %v1206, %v275
    %v1208 = vrot.slane %v1207, 4
    %v1209 = vadd.f32 %v1207, %v1208
    %v1210 = vrot.slane %v1209, 2
    %v1211 = vadd.f32 %v1209, %v1210
    %v1212 = vrot.slane %v1211, 1
    %v1213 = vadd.f32 %v1211, %v1212
    %v1214 = vrcp.pop 64.0
    %v1215 = vmul.f32 %v1213, %v1214
    %v1216 = vmul.f32 %v52, %v1215
    %v1217 = vmul.f32 %v53, %v1215
    %1218 = vadd.xlane.f32.xlu0 %v1216
    %v1219 = vpop.xlane.xlu0 %1218
    %1220 = vadd.xlane.f32.xlu0 %v1217
    %v1221 = vpop.xlane.xlu0 %1220
    %v1222 = vadd.f32 %v1191, %v1219
    %v1223 = vadd.f32 %v1196, %v1221
    %v1224 = vmax.f32 %v1222, %v1223
    %v1225 = vrot.slane %v1224, 4
    %v1226 = vmax.f32 %v1224, %v1225
    %v1227 = vrot.slane %v1226, 2
    %v1228 = vmax.f32 %v1226, %v1227
    %v1229 = vrot.slane %v1228, 1
    %v1230 = vmax.f32 %v1228, %v1229
    %v1231 = vadd.s32 %v1200, 8
    %vm1232 = vcmp.ge.f32.partialorder %v1222, %v1230
    %vm1233 = vcmp.ge.f32.partialorder %v1223, %v1230
    %v1234 = vsel %vm1232, %v1200, 16
    %v1235 = vsel %vm1233, %v1231, 16
    %vm1236 = vcmp.lt.s32.totalorder %v1234, %v1235
    %v1237 = vsel %vm1236, %v1234, %v1235
    %v1238 = vrot.slane %v1237, 4
    %vm1239 = vcmp.lt.s32.totalorder %v1237, %v1238
    %v1240 = vsel %vm1239, %v1237, %v1238
    %v1241 = vrot.slane %v1240, 2
    %vm1242 = vcmp.lt.s32.totalorder %v1240, %v1241
    %v1243 = vsel %vm1242, %v1240, %v1241
    %v1244 = vrot.slane %v1243, 1
    %vm1245 = vcmp.lt.s32.totalorder %v1243, %v1244
    %v1246 = vsel %vm1245, %v1243, %v1244
    %vm1247 = vcmp.eq.s32.totalorder %v1200, 0
    %v1248 = vsel %vm1247, %v1246, 0
    %v1249 = vadd.f32 %v276, %v277
    %v1250 = vadd.f32 %v1249, %v278
    %v1251 = vadd.f32 %v1250, %v279
    %v1252 = vadd.f32 %v1251, %v280
    %v1253 = vadd.f32 %v1252, %v281
    %v1254 = vadd.f32 %v1253, %v282
    %v1255 = vadd.f32 %v1254, %v283
    %v1256 = vrot.slane %v1255, 4
    %v1257 = vadd.f32 %v1255, %v1256
    %v1258 = vrot.slane %v1257, 2
    %v1259 = vadd.f32 %v1257, %v1258
    %v1260 = vrot.slane %v1259, 1
    %v1261 = vadd.f32 %v1259, %v1260
    %v1262 = vmul.f32 %v1261, %v1214
    %v1263 = vmul.f32 %v52, %v1262
    %v1264 = vmul.f32 %v53, %v1262
    %1265 = vadd.xlane.f32.xlu0 %v1263
    %v1266 = vpop.xlane.xlu0 %1265
    %1267 = vadd.xlane.f32.xlu0 %v1264
    %v1268 = vpop.xlane.xlu0 %1267
    %v1269 = vadd.f32 %v1191, %v1266
    %v1270 = vadd.f32 %v1196, %v1268
    %v1271 = vmax.f32 %v1269, %v1270
    %v1272 = vrot.slane %v1271, 4
    %v1273 = vmax.f32 %v1271, %v1272
    %v1274 = vrot.slane %v1273, 2
    %v1275 = vmax.f32 %v1273, %v1274
    %v1276 = vrot.slane %v1275, 1
    %v1277 = vmax.f32 %v1275, %v1276
    %vm1278 = vcmp.ge.f32.partialorder %v1269, %v1277
    %vm1279 = vcmp.ge.f32.partialorder %v1270, %v1277
    %v1280 = vsel %vm1278, %v1200, 16
    %v1281 = vsel %vm1279, %v1231, 16
    %vm1282 = vcmp.lt.s32.totalorder %v1280, %v1281
    %v1283 = vsel %vm1282, %v1280, %v1281
    %v1284 = vrot.slane %v1283, 4
    %vm1285 = vcmp.lt.s32.totalorder %v1283, %v1284
    %v1286 = vsel %vm1285, %v1283, %v1284
    %v1287 = vrot.slane %v1286, 2
    %vm1288 = vcmp.lt.s32.totalorder %v1286, %v1287
    %v1289 = vsel %vm1288, %v1286, %v1287
    %v1290 = vrot.slane %v1289, 1
    %vm1291 = vcmp.lt.s32.totalorder %v1289, %v1290
    %v1292 = vsel %vm1291, %v1289, %v1290
    %vm1293 = vcmp.eq.s32.totalorder %v1200, 1
    %v1294 = vsel %vm1293, %v1292, %v1248
    %1295 = vst [vmem:[#allocation6] sm:$0x3] %v1294
    // Predicated region
    $region18: #{tpu_custom_call.1} parent=1 // pred_check
      _
    $region19: #{tpu_custom_call.1} parent=1 // pred_check_branch
      %1297 = sbr.rel (0) target = $region21
    $region20: #{tpu_custom_call.1} parent=1 // pred_region
      %s1299 = ssub.s32 2048, 2048
      %1300 = vsyncadd [#allocation4], %s1299
      %s1301 = sshll.u32 [#allocation5], 4
      %s1302 = int_to_ptr.vmem [resolvable:$true] %s1301
      %1307 = dma.vmem_to_hbm [thread:$0]  %s1302, 2048, %s3, [#allocation4], 128, 128, 8
    $region21: #{tpu_custom_call.1} parent=1 // pred_fallthru
      _
    // Predicated region
    $region22: #{tpu_custom_call.1} parent=1 // pred_check
      _
    $region23: #{tpu_custom_call.1} parent=1 // pred_check_branch
      %1309 = sbr.rel (0) target = $region25
    $region24: #{tpu_custom_call.1} parent=1 // pred_region
      %s1311 = ssub.s32 32, 32
      %1312 = vsyncadd [#allocation7], %s1311
      %s1314 = sshll.u32 [#allocation6], 4
      %s1315 = int_to_ptr.vmem [resolvable:$true] %s1314
      %1317 = dma.vmem_to_hbm [thread:$0]  %s1315, 32, %s4, [#allocation7]
    $region25: #{tpu_custom_call.1} parent=1 // pred_fallthru
      _
    // Predicated region
    $region26: #{tpu_custom_call.1} parent=1 // pred_check
      _
    $region27: #{tpu_custom_call.1} parent=1 // pred_check_branch
      %1319 = sbr.rel (0) target = $region29
    $region28: #{tpu_custom_call.1} parent=1 // pred_region
      %1320 = dma.done [#allocation4], 2048
    $region29: #{tpu_custom_call.1} parent=1 // pred_fallthru
      _
    // Predicated region
    $region30: #{tpu_custom_call.1} parent=1 // pred_check
      _
    $region31: #{tpu_custom_call.1} parent=1 // pred_check_branch
      %1322 = sbr.rel (0) target = $region33
    $region32: #{tpu_custom_call.1} parent=1 // pred_region
      %1323 = dma.done [#allocation7], 32
    $region33: #{tpu_custom_call.1} parent=1 // pred_fallthru
      _
    %1324 = vsyncpa [#allocation3], 1
    %1325 = vsyncpa [#allocation4], 1
    %1326 = vsyncpa [#allocation7], 1

</llo_original>
